<compile_context>
chip_gen: v7x
topology: tpu7x:2x2x1
jax: 0.10.0
libtpu: 0.0.40
codegen_flags: <defaults>
</compile_context>

<pallas_src>
import functools

import jax
import jax.numpy as jnp
from jax.experimental import pallas as pl
from jax.experimental.pallas import tpu as pltpu

C = 128          # hidden channel count fixed by the module (Conv1d(128,128,1))
N_OBJ = 2        # objectness_loss_type == 'cross_entropy'
N_BOX = 6        # axis-aligned box deltas
N_CTR = 1        # centerness
N_PRED = N_OBJ + N_BOX + N_CTR   # = 9 real predictor channels
N_PRED_PAD = 16                  # predictor rows padded to 16 for clean layout


def _rpn_head_kernel(f_ref, w1_ref, t1_ref, w2_ref, t2_ref, wp_ref, bp_ref,
                     pred_ref, *, use_exp):
    # f_ref block: (C, tp) bf16 -- points on lanes, channels on sublanes.
    # Weights are (out, in) with BN scale pre-folded, stored in bf16.
    f = f_ref[...].astype(jnp.bfloat16)   # no-op when producer already bf16

    # conv1 (1x1, BN-scale folded) + BN shift + ReLU
    h1 = jnp.dot(w1_ref[...], f, preferred_element_type=jnp.float32)
    h1 = jnp.maximum(h1 + t1_ref[...], 0.0)                       # (C, tp) f32

    # conv2 (1x1, BN-scale folded) + BN shift + ReLU
    h2 = jnp.dot(w2_ref[...], h1.astype(jnp.bfloat16),
                 preferred_element_type=jnp.float32)
    h2 = jnp.maximum(h2 + t2_ref[...], 0.0)                       # (C, tp) f32

    # fused predictors: rows [objectness(2) | box(6) | centerness(1) | pad(7)]
    pred = jnp.dot(wp_ref[...], h2.astype(jnp.bfloat16),
                   preferred_element_type=jnp.float32) + bp_ref[...]  # (16, tp)

    if use_exp:
        # exp only the box-delta rows; row mask avoids sublane slicing/relayout.
        row = jax.lax.broadcasted_iota(jnp.int32, pred.shape, 0)
        is_box = (row >= N_OBJ) & (row < N_OBJ + N_BOX)
        pred = jnp.where(is_box, jnp.exp(pred), pred)

    pred_ref[...] = pred   # single aligned (16, tp) lane-dense store


def rpn_head_forward(xyz, features_ncp, params, *, use_exp=False, tp=4096):
    """features_ncp: (N, C=128, P), preferably bfloat16 (same channel-major
    layout as the PyTorch Conv1d input; f32 also accepted, just more HBM
    traffic).  Returns (pred_objectness_logits (N,P,2), pred_box_reg (N,P,6),
    None, None, pred_centerness (N,P)) matching the module's outputs."""
    # TODO(synk): fuse_xyz > 0 positional-encoding branch not implemented
    # (external build_positional_encoding_layer); xyz accepted but unused.
    del xyz
    N, Cin, P = features_ncp.shape
    assert Cin == C

    # Point tile: multiple of 128 lanes; only clamp down when P is small so a
    # short point cloud becomes a single tile per batch element.
    tp = max(128, (int(tp) // 128) * 128)
    tp = min(tp, ((P + 127) // 128) * 128)
    n_p_tiles = pl.cdiv(P, tp)          # ragged last block handled by Pallas

    kernel = functools.partial(_rpn_head_kernel, use_exp=use_exp)

    feat_spec = pl.BlockSpec((pl.Squeezed(), C, tp), lambda n, p: (n, 0, p))
    w_spec = pl.BlockSpec((C, C), lambda n, p: (0, 0))
    t_spec = pl.BlockSpec((C, 1), lambda n, p: (0, 0))
    wp_spec = pl.BlockSpec((N_PRED_PAD, C), lambda n, p: (0, 0))
    bp_spec = pl.BlockSpec((N_PRED_PAD, 1), lambda n, p: (0, 0))
    out_spec = pl.BlockSpec((pl.Squeezed(), N_PRED_PAD, tp),
                            lambda n, p: (n, 0, p))

    feat_bytes = features_ncp.size * features_ncp.dtype.itemsize
    out_bytes = N * N_PRED_PAD * P * 4
    w_bytes = (2 * C * C + N_PRED_PAD * C) * 2 + (2 * C + N_PRED_PAD) * 4
    cost = pl.CostEstimate(
        flops=2 * N * P * (2 * C * C + C * N_PRED_PAD),
        transcendentals=(N * P * N_PRED_PAD) if use_exp else 0,
        bytes_accessed=feat_bytes + out_bytes + w_bytes)

    pred = pl.pallas_call(
        kernel,
        out_shape=jax.ShapeDtypeStruct((N, N_PRED_PAD, P), jnp.float32),
        grid_spec=pltpu.PrefetchScalarGridSpec(
            num_scalar_prefetch=0,
            grid=(N, n_p_tiles),
            in_specs=[feat_spec, w_spec, t_spec, w_spec, t_spec,
                      wp_spec, bp_spec],
            out_specs=out_spec),
        compiler_params=pltpu.CompilerParams(
            dimension_semantics=("parallel", "parallel")),
        cost_estimate=cost,
    )(features_ncp, params["w1"], params["t1"], params["w2"], params["t2"],
      params["wp"], params["bp"])

    # Wrapper glue: one transpose over the 9 real predictor rows only
    # (9/128 of the feature bytes), then cheap slices.
    pred_t = jnp.transpose(pred[:, :N_PRED, :], (0, 2, 1))   # (N, P, 9)
    pred_objectness_logits = pred_t[..., 0:N_OBJ]             # (N, P, 2)
    pred_box_reg = pred_t[..., N_OBJ:N_OBJ + N_BOX]           # (N, P, 6)
    pred_centerness = pred_t[..., N_OBJ + N_BOX]              # (N, P)
    return pred_objectness_logits, pred_box_reg, None, None, pred_centerness


def init_params(key):
    """Deterministic init mirroring the module's __init__ (fresh weights,
    BatchNorm in inference mode: scale folded into conv weight, shift kept).
    bf16 weight copies are built HERE, once, not per forward call."""
    eps = 1e-5
    k1, k2, ko, kb, kc = jax.random.split(key, 5)

    def conv_bn(kw):
        # c2_msra_fill ~ kaiming_normal_(fan_out) with bias 0; kernel_size=1.
        std = (2.0 / C) ** 0.5
        w = jax.random.normal(kw, (C, C), jnp.float32) * std      # (out, in)
        b = jnp.zeros((C,), jnp.float32)
        # fresh BatchNorm1d: gamma=1, beta=0, running_mean=0, running_var=1
        gamma = jnp.ones((C,), jnp.float32)
        beta = jnp.zeros((C,), jnp.float32)
        mean = jnp.zeros((C,), jnp.float32)
        var = jnp.ones((C,), jnp.float32)
        scale = gamma / jnp.sqrt(var + eps)
        w_fold = (w * scale[:, None]).astype(jnp.bfloat16)  # fold BN scale
        shift = (b - mean) * scale + beta
        return w_fold, shift[:, None]              # (C, C) bf16, (C, 1) f32

    w1, t1 = conv_bn(k1)
    w2, t2 = conv_bn(k2)

    # predictors: normal(std=0.001), bias = 0; fused + padded to 16 rows.
    wo = jax.random.normal(ko, (N_OBJ, C), jnp.float32) * 1e-3
    wb = jax.random.normal(kb, (N_BOX, C), jnp.float32) * 1e-3
    wc = jax.random.normal(kc, (N_CTR, C), jnp.float32) * 1e-3
    wp = jnp.zeros((N_PRED_PAD, C), jnp.float32)
    wp = wp.at[0:N_PRED].set(jnp.concatenate([wo, wb, wc], axis=0))
    wp = wp.astype(jnp.bfloat16)
    bp = jnp.zeros((N_PRED_PAD, 1), jnp.float32)

    return dict(w1=w1, t1=t1, w2=w2, t2=t2, wp=wp, bp=bp)


def _ref_forward(features_ncp, params, use_exp=False):
    """Pure-JAX f32 reference of the same forward for a correctness check."""
    f = features_ncp.astype(jnp.float32)                     # (N, C, P)
    w1 = params["w1"].astype(jnp.float32)
    w2 = params["w2"].astype(jnp.float32)
    wp = params["wp"].astype(jnp.float32)
    h1 = jnp.maximum(jnp.einsum('oc,ncp->nop', w1, f) + params["t1"][None], 0.0)
    h2 = jnp.maximum(jnp.einsum('oc,ncp->nop', w2, h1) + params["t2"][None], 0.0)
    pred = jnp.einsum('oc,ncp->nop', wp, h2) + params["bp"][None]
    obj = jnp.transpose(pred[:, 0:N_OBJ, :], (0, 2, 1))
    box = jnp.transpose(pred[:, N_OBJ:N_OBJ + N_BOX, :], (0, 2, 1))
    if use_exp:
        box = jnp.exp(box)
    ctr = pred[:, N_OBJ + N_BOX, :]
    return obj, box, ctr


if __name__ == "__main__":
    key = jax.random.PRNGKey(0)
    kparam, kfeat, kxyz = jax.random.split(key, 3)

    N, P = 2, 1000      # P is NOT a tile multiple -> exercises the ragged path
    params = init_params(kparam)
    # Producer delivers bf16 channel-major features (the layout & dtype the
    # kernel is optimized for).
    features = jax.random.normal(kfeat, (N, C, P), jnp.float32).astype(jnp.bfloat16)
    xyz = jax.random.normal(kxyz, (N, P, 3), jnp.float32)     # unused (fuse_xyz=0)

    obj, box, _, _, ctr = rpn_head_forward(xyz, features, params,
                                           use_exp=False, tp=4096)
    jax.block_until_ready((obj, box, ctr))

    obj_r, box_r, ctr_r = _ref_forward(features, params, use_exp=False)
    assert obj.shape == (N, P, N_OBJ)
    assert box.shape == (N, P, N_BOX)
    assert ctr.shape == (N, P)
    # bf16 MXU operands (f32 accumulation) vs f32 reference -> relaxed tolerance.
    assert jnp.allclose(obj, obj_r, rtol=5e-2, atol=5e-3)
    assert jnp.allclose(box, box_r, rtol=5e-2, atol=5e-3)
    assert jnp.allclose(ctr, ctr_r, rtol=5e-2, atol=5e-3)

    print("KERNEL_OK")
</pallas_src>

<mosaic_0001>
module attributes {stable_mosaic.version = 11 : i64} {
  func.func @_rpn_head_kernel(%arg0: i32, %arg1: i32, %arg2: memref<1x128x1024xbf16, #tpu.memory_space<vmem>>, %arg3: memref<128x128xbf16, #tpu.memory_space<vmem>>, %arg4: memref<128x1xf32, #tpu.memory_space<vmem>>, %arg5: memref<128x128xbf16, #tpu.memory_space<vmem>>, %arg6: memref<128x1xf32, #tpu.memory_space<vmem>>, %arg7: memref<16x128xbf16, #tpu.memory_space<vmem>>, %arg8: memref<16x1xf32, #tpu.memory_space<vmem>>, %arg9: memref<1x16x1024xf32, #tpu.memory_space<vmem>>) attributes {dimension_semantics = [#tpu.dimension_semantics<parallel>, #tpu.dimension_semantics<parallel>], iteration_bounds = array<i64: 2, 1>, scalar_prefetch = 0 : i64, scratch_operands = 0 : i64, tpu.core_type = #tpu.core_type<tc>, window_params = [{transform_indices = @transform_0, window_bounds = array<i64: 1, 128, 1024>}, {pipeline_mode = #tpu.pipeline_mode<synchronous>, transform_indices = @transform_1, window_bounds = array<i64: 128, 128>}, {pipeline_mode = #tpu.pipeline_mode<synchronous>, transform_indices = @transform_2, window_bounds = array<i64: 128, 1>}, {pipeline_mode = #tpu.pipeline_mode<synchronous>, transform_indices = @transform_3, window_bounds = array<i64: 128, 128>}, {pipeline_mode = #tpu.pipeline_mode<synchronous>, transform_indices = @transform_4, window_bounds = array<i64: 128, 1>}, {pipeline_mode = #tpu.pipeline_mode<synchronous>, transform_indices = @transform_5, window_bounds = array<i64: 16, 128>}, {pipeline_mode = #tpu.pipeline_mode<synchronous>, transform_indices = @transform_6, window_bounds = array<i64: 16, 1>}, {transform_indices = @transform_7, window_bounds = array<i64: 1, 16, 1024>}]} {
    %c0 = arith.constant 0 : index
    %c0_0 = arith.constant 0 : index
    %c0_1 = arith.constant 0 : index
    %0 = vector.load %arg2[%c0, %c0_0, %c0_1] : memref<1x128x1024xbf16, #tpu.memory_space<vmem>>, vector<1x128x1024xbf16>
    %1 = vector.shape_cast %0 : vector<1x128x1024xbf16> to vector<128x1024xbf16>
    %c0_2 = arith.constant 0 : index
    %c0_3 = arith.constant 0 : index
    %2 = vector.load %arg3[%c0_2, %c0_3] : memref<128x128xbf16, #tpu.memory_space<vmem>>, vector<128x128xbf16>
    %cst = arith.constant dense<0.000000e+00> : vector<128x1024xf32>
    %3 = tpu.matmul %2, %1, %cst {dimension_numbers = #tpu.dot_dimension_numbers<[1], [0], [0], [1], [0, 0, 1, 1], [], []>} : vector<128x128xbf16>, vector<128x1024xbf16>, vector<128x1024xf32> -> vector<128x1024xf32>
    %c0_4 = arith.constant 0 : index
    %c0_5 = arith.constant 0 : index
    %4 = vector.load %arg4[%c0_4, %c0_5] : memref<128x1xf32, #tpu.memory_space<vmem>>, vector<128x1xf32>
    %5 = vector.broadcast %4 : vector<128x1xf32> to vector<128x1024xf32>
    %6 = arith.addf %3, %5 : vector<128x1024xf32>
    %cst_6 = arith.constant 0.000000e+00 : f32
    %7 = vector.broadcast %cst_6 : f32 to vector<128x1024xf32>
    %8 = arith.maximumf %6, %7 : vector<128x1024xf32>
    %c0_7 = arith.constant 0 : index
    %c0_8 = arith.constant 0 : index
    %9 = vector.load %arg5[%c0_7, %c0_8] : memref<128x128xbf16, #tpu.memory_space<vmem>>, vector<128x128xbf16>
    %10 = arith.truncf %8 : vector<128x1024xf32> to vector<128x1024xbf16>
    %cst_9 = arith.constant dense<0.000000e+00> : vector<128x1024xf32>
    %11 = tpu.matmul %9, %10, %cst_9 {dimension_numbers = #tpu.dot_dimension_numbers<[1], [0], [0], [1], [0, 0, 1, 1], [], []>} : vector<128x128xbf16>, vector<128x1024xbf16>, vector<128x1024xf32> -> vector<128x1024xf32>
    %c0_10 = arith.constant 0 : index
    %c0_11 = arith.constant 0 : index
    %12 = vector.load %arg6[%c0_10, %c0_11] : memref<128x1xf32, #tpu.memory_space<vmem>>, vector<128x1xf32>
    %13 = vector.broadcast %12 : vector<128x1xf32> to vector<128x1024xf32>
    %14 = arith.addf %11, %13 : vector<128x1024xf32>
    %cst_12 = arith.constant 0.000000e+00 : f32
    %15 = vector.broadcast %cst_12 : f32 to vector<128x1024xf32>
    %16 = arith.maximumf %14, %15 : vector<128x1024xf32>
    %c0_13 = arith.constant 0 : index
    %c0_14 = arith.constant 0 : index
    %17 = vector.load %arg7[%c0_13, %c0_14] : memref<16x128xbf16, #tpu.memory_space<vmem>>, vector<16x128xbf16>
    %18 = arith.truncf %16 : vector<128x1024xf32> to vector<128x1024xbf16>
    %cst_15 = arith.constant dense<0.000000e+00> : vector<16x1024xf32>
    %19 = tpu.matmul %17, %18, %cst_15 {dimension_numbers = #tpu.dot_dimension_numbers<[1], [0], [0], [1], [0, 0, 1, 1], [], []>} : vector<16x128xbf16>, vector<128x1024xbf16>, vector<16x1024xf32> -> vector<16x1024xf32>
    %c0_16 = arith.constant 0 : index
    %c0_17 = arith.constant 0 : index
    %20 = vector.load %arg8[%c0_16, %c0_17] : memref<16x1xf32, #tpu.memory_space<vmem>>, vector<16x1xf32>
    %21 = vector.broadcast %20 : vector<16x1xf32> to vector<16x1024xf32>
    %22 = arith.addf %19, %21 : vector<16x1024xf32>
    %c0_18 = arith.constant 0 : index
    %c0_19 = arith.constant 0 : index
    %c0_20 = arith.constant 0 : index
    %23 = vector.load %arg9[%c0_18, %c0_19, %c0_20] : memref<1x16x1024xf32, #tpu.memory_space<vmem>>, vector<1x16x1024xf32>
    %24 = vector.shape_cast %23 : vector<1x16x1024xf32> to vector<16x1024xf32>
    %25 = vector.shape_cast %22 : vector<16x1024xf32> to vector<1x16x1024xf32>
    tpu.vector_store %arg9[%c0_18, %c0_19, %c0_20], %25 {strides = array<i32>} : memref<1x16x1024xf32, #tpu.memory_space<vmem>>, vector<1x16x1024xf32>,
    return
  }
  func.func @transform_0(%arg0: i32, %arg1: i32) -> (i32, i32, i32) {
    %c0_i32 = arith.constant 0 : i32
    %c0_i32_0 = arith.constant 0 : i32
    return %arg0, %c0_i32, %arg1 : i32, i32, i32
  }
  func.func @transform_1(%arg0: i32, %arg1: i32) -> (i32, i32) {
    %c0_i32 = arith.constant 0 : i32
    %c0_i32_0 = arith.constant 0 : i32
    %c0_i32_1 = arith.constant 0 : i32
    return %c0_i32, %c0_i32_0 : i32, i32
  }
  func.func @transform_2(%arg0: i32, %arg1: i32) -> (i32, i32) {
    %c0_i32 = arith.constant 0 : i32
    %c0_i32_0 = arith.constant 0 : i32
    %c0_i32_1 = arith.constant 0 : i32
    return %c0_i32, %c0_i32_0 : i32, i32
  }
  func.func @transform_3(%arg0: i32, %arg1: i32) -> (i32, i32) {
    %c0_i32 = arith.constant 0 : i32
    %c0_i32_0 = arith.constant 0 : i32
    %c0_i32_1 = arith.constant 0 : i32
    return %c0_i32, %c0_i32_0 : i32, i32
  }
  func.func @transform_4(%arg0: i32, %arg1: i32) -> (i32, i32) {
    %c0_i32 = arith.constant 0 : i32
    %c0_i32_0 = arith.constant 0 : i32
    %c0_i32_1 = arith.constant 0 : i32
    return %c0_i32, %c0_i32_0 : i32, i32
  }
  func.func @transform_5(%arg0: i32, %arg1: i32) -> (i32, i32) {
    %c0_i32 = arith.constant 0 : i32
    %c0_i32_0 = arith.constant 0 : i32
    %c0_i32_1 = arith.constant 0 : i32
    return %c0_i32, %c0_i32_0 : i32, i32
  }
  func.func @transform_6(%arg0: i32, %arg1: i32) -> (i32, i32) {
    %c0_i32 = arith.constant 0 : i32
    %c0_i32_0 = arith.constant 0 : i32
    %c0_i32_1 = arith.constant 0 : i32
    return %c0_i32, %c0_i32_0 : i32, i32
  }
  func.func @transform_7(%arg0: i32, %arg1: i32) -> (i32, i32, i32) {
    %c0_i32 = arith.constant 0 : i32
    %c0_i32_0 = arith.constant 0 : i32
    return %arg0, %c0_i32, %arg1 : i32, i32, i32
  }
}

</mosaic_0001>

<llo_original>
// kernel: tpu_custom_call.1
$region0: #{tpu_custom_call.1}
  #allocation0 [shape = 'u32[]', space=smem, size = 0x4, offset = 0x4, fixed_abs, tag = 'smem constant byte address 0x4 - core index']
  #allocation1 [shape = 'u32[144,128]{1,0:T(1,128)}', space=vmem, size = 0x12000, scoped, tag = 'internal scratch']
  %s0 = inlined_call_operand.vmem [shape: bf16[2,128,1000], index: 0, kind: input, shape index: {}]
  %s1 = inlined_call_operand.vmem [shape: bf16[128,128], index: 1, kind: input, shape index: {}]
  %s2 = inlined_call_operand.vmem [shape: f32[128,1], index: 2, kind: input, shape index: {}]
  %s3 = inlined_call_operand.vmem [shape: bf16[128,128], index: 3, kind: input, shape index: {}]
  %s4 = inlined_call_operand.vmem [shape: f32[128,1], index: 4, kind: input, shape index: {}]
  %s5 = inlined_call_operand.vmem [shape: bf16[16,128], index: 5, kind: input, shape index: {}]
  %s6 = inlined_call_operand.vmem [shape: f32[16,1], index: 6, kind: input, shape index: {}]
  %s7 = inlined_call_operand.hbm [shape: f32[2,16,1000], index: 7, kind: output, shape index: {}]
  %s8 = sld [smem:[#allocation0]]
  $region61: #{tpu_custom_call.1} parent=0
    _
  %s10 = ssub.s32 1, %s8
  %s11 = scalar_select 0, %s10, %s8
  $region1: #{tpu_custom_call.1} parent=0
    #allocation2 [shape = 'u8[131072]{0}', space=vmem, size = 0x20000, scoped, tag = 'output window, operand 0']
    #allocation3 [shape = 's32[2]{0}', space=sflag, size = 0x8, scoped, tag = 'scoped memory for tpu_custom_call.1']
    %12 = vsyncpa [#allocation3], 0
    %s13 = scalar_lea.sflag [#allocation3], 1
    %14 = vsyncpa %s13, 0
    loop: start=0, step=1, limit=4
    $region2: #{tpu_custom_call.1} parent=1 // loop_pre_header
      _
    $region3: #{tpu_custom_call.1} parent=1 // loop_header
      %s16 = sphi 0, %s20
      %p17 = scmp.ge.s32.totalorder %s16, 4
      %s23 = sphi 0, %s35
      %s24 = sphi 0, %s31
      %s25 = sphi 0, %s23
      %s26 = sphi 0, %s24
      %s27 = sphi 0, %s25
      %s28 = sphi 0, %s26
      %s40 = sphi 0, %s42
      %s43 = sphi 0, %s40
      %s44 = sphi 0, %s43
      %s60 = sphi 0, %s44
      %s64 = sphi 0, %s64
      %s66 = sphi 0, %s64
      %s67 = sphi 0, %s66
      %s81 = sphi 0, %s67
      %s85 = sphi 0, %s85
      %s87 = sphi 0, %s85
      %s88 = sphi 0, %s87
      %s102 = sphi 0, %s88
      %s106 = sphi 0, %s106
      %s108 = sphi 0, %s106
      %s109 = sphi 0, %s108
      %s123 = sphi 0, %s109
      %s127 = sphi 0, %s127
      %s129 = sphi 0, %s127
      %s130 = sphi 0, %s129
      %s144 = sphi 0, %s130
      %s148 = sphi 0, %s148
      %s150 = sphi 0, %s148
      %s151 = sphi 0, %s150
      %s165 = sphi 0, %s151
      %s169 = sphi 0, %s169
      %s171 = sphi 0, %s169
      %s172 = sphi 0, %s171
      %s186 = sphi 0, %s172
      %s194 = sphi 0, %s196
      %s197 = sphi 0, %s194
      %s198 = sphi 0, %s197
      %s214 = sphi 0, %s198
    $region4: #{tpu_custom_call.1} parent=1 // loop_header_branch
      %19 = sbr.rel (%p17) target = $region8
    $region5: #{tpu_custom_call.1} parent=1 // loop_body
      %s21 = ssub.s32 %s16, 1
      %s22 = ssub.s32 %s16, 2
      %s29 = sadd.s32 1, %s24
      %p30 = scmp.ge.s32.totalorder %s29, 1
      %s31 = scalar_select %p30, 0, %s29
      %s32 = sadd.s32 1, %s23
      %s33 = scalar_select %p30, %s32, %s23
      %p34 = scmp.ge.s32.totalorder %s33, 2
      %s35 = scalar_select %p34, 0, %s33
      %s36 = ssub.s32 %s23, %s35
      %s37 = ssub.s32 %s24, %s31
      %s38 = sor.u32 %s36, %s37
      %p39 = scmp.eq.s32.totalorder %s38, 0
      %s41 = sadd.s32 %s40, 1
      %s42 = scalar_select %p39, %s40, %s41
      %p45 = pneg %p39
      %p46 = scmp.eq.s32.totalorder %s16, 1
      %p47 = por %p45, %p46
      %p48 = scmp.ne.s32.totalorder %s40, %s43
      %p49 = scmp.eq.s32.totalorder %s16, 0
      %p50 = por %p48, %p49
      %p51 = scmp.ne.s32.totalorder %s40, %s43
      %p52 = scmp.eq.s32.totalorder %s21, 1
      %p53 = por %p51, %p52
      %p54 = scmp.ne.s32.totalorder %s43, %s44
      %p55 = scmp.eq.s32.totalorder %s21, 0
      %p56 = por %p54, %p55
      %p57 = scmp.ne.s32.totalorder %s43, %s44
      %p58 = scmp.eq.s32.totalorder %s22, 1
      %p59 = por %p57, %p58
      %p61 = scmp.ne.s32.totalorder %s44, %s60
      %p62 = scmp.eq.s32.totalorder %s22, 0
      %p63 = por %p61, %p62
      %s65 = sadd.s32 %s64, 1
      %p68 = scmp.eq.s32.totalorder %s16, 1
      %p69 = scmp.ne.s32.totalorder %s64, %s66
      %p70 = scmp.eq.s32.totalorder %s16, 0
      %p71 = por %p69, %p70
      %p72 = scmp.ne.s32.totalorder %s64, %s66
      %p73 = scmp.eq.s32.totalorder %s21, 1
      %p74 = por %p72, %p73
      %p75 = scmp.ne.s32.totalorder %s66, %s67
      %p76 = scmp.eq.s32.totalorder %s21, 0
      %p77 = por %p75, %p76
      %p78 = scmp.ne.s32.totalorder %s66, %s67
      %p79 = scmp.eq.s32.totalorder %s22, 1
      %p80 = por %p78, %p79
      %p82 = scmp.ne.s32.totalorder %s67, %s81
      %p83 = scmp.eq.s32.totalorder %s22, 0
      %p84 = por %p82, %p83
      %s86 = sadd.s32 %s85, 1
      %p89 = scmp.eq.s32.totalorder %s16, 1
      %p90 = scmp.ne.s32.totalorder %s85, %s87
      %p91 = scmp.eq.s32.totalorder %s16, 0
      %p92 = por %p90, %p91
      %p93 = scmp.ne.s32.totalorder %s85, %s87
      %p94 = scmp.eq.s32.totalorder %s21, 1
      %p95 = por %p93, %p94
      %p96 = scmp.ne.s32.totalorder %s87, %s88
      %p97 = scmp.eq.s32.totalorder %s21, 0
      %p98 = por %p96, %p97
      %p99 = scmp.ne.s32.totalorder %s87, %s88
      %p100 = scmp.eq.s32.totalorder %s22, 1
      %p101 = por %p99, %p100
      %p103 = scmp.ne.s32.totalorder %s88, %s102
      %p104 = scmp.eq.s32.totalorder %s22, 0
      %p105 = por %p103, %p104
      %s107 = sadd.s32 %s106, 1
      %p110 = scmp.eq.s32.totalorder %s16, 1
      %p111 = scmp.ne.s32.totalorder %s106, %s108
      %p112 = scmp.eq.s32.totalorder %s16, 0
      %p113 = por %p111, %p112
      %p114 = scmp.ne.s32.totalorder %s106, %s108
      %p115 = scmp.eq.s32.totalorder %s21, 1
      %p116 = por %p114, %p115
      %p117 = scmp.ne.s32.totalorder %s108, %s109
      %p118 = scmp.eq.s32.totalorder %s21, 0
      %p119 = por %p117, %p118
      %p120 = scmp.ne.s32.totalorder %s108, %s109
      %p121 = scmp.eq.s32.totalorder %s22, 1
      %p122 = por %p120, %p121
      %p124 = scmp.ne.s32.totalorder %s109, %s123
      %p125 = scmp.eq.s32.totalorder %s22, 0
      %p126 = por %p124, %p125
      %s128 = sadd.s32 %s127, 1
      %p131 = scmp.eq.s32.totalorder %s16, 1
      %p132 = scmp.ne.s32.totalorder %s127, %s129
      %p133 = scmp.eq.s32.totalorder %s16, 0
      %p134 = por %p132, %p133
      %p135 = scmp.ne.s32.totalorder %s127, %s129
      %p136 = scmp.eq.s32.totalorder %s21, 1
      %p137 = por %p135, %p136
      %p138 = scmp.ne.s32.totalorder %s129, %s130
      %p139 = scmp.eq.s32.totalorder %s21, 0
      %p140 = por %p138, %p139
      %p141 = scmp.ne.s32.totalorder %s129, %s130
      %p142 = scmp.eq.s32.totalorder %s22, 1
      %p143 = por %p141, %p142
      %p145 = scmp.ne.s32.totalorder %s130, %s144
      %p146 = scmp.eq.s32.totalorder %s22, 0
      %p147 = por %p145, %p146
      %s149 = sadd.s32 %s148, 1
      %p152 = scmp.eq.s32.totalorder %s16, 1
      %p153 = scmp.ne.s32.totalorder %s148, %s150
      %p154 = scmp.eq.s32.totalorder %s16, 0
      %p155 = por %p153, %p154
      %p156 = scmp.ne.s32.totalorder %s148, %s150
      %p157 = scmp.eq.s32.totalorder %s21, 1
      %p158 = por %p156, %p157
      %p159 = scmp.ne.s32.totalorder %s150, %s151
      %p160 = scmp.eq.s32.totalorder %s21, 0
      %p161 = por %p159, %p160
      %p162 = scmp.ne.s32.totalorder %s150, %s151
      %p163 = scmp.eq.s32.totalorder %s22, 1
      %p164 = por %p162, %p163
      %p166 = scmp.ne.s32.totalorder %s151, %s165
      %p167 = scmp.eq.s32.totalorder %s22, 0
      %p168 = por %p166, %p167
      %s170 = sadd.s32 %s169, 1
      %p173 = scmp.eq.s32.totalorder %s16, 1
      %p174 = scmp.ne.s32.totalorder %s169, %s171
      %p175 = scmp.eq.s32.totalorder %s16, 0
      %p176 = por %p174, %p175
      %p177 = scmp.ne.s32.totalorder %s169, %s171
      %p178 = scmp.eq.s32.totalorder %s21, 1
      %p179 = por %p177, %p178
      %p180 = scmp.ne.s32.totalorder %s171, %s172
      %p181 = scmp.eq.s32.totalorder %s21, 0
      %p182 = por %p180, %p181
      %p183 = scmp.ne.s32.totalorder %s171, %s172
      %p184 = scmp.eq.s32.totalorder %s22, 1
      %p185 = por %p183, %p184
      %p187 = scmp.ne.s32.totalorder %s172, %s186
      %p188 = scmp.eq.s32.totalorder %s22, 0
      %p189 = por %p187, %p188
      %s190 = ssub.s32 %s23, %s35
      %s191 = ssub.s32 %s24, %s31
      %s192 = sor.u32 %s190, %s191
      %p193 = scmp.eq.s32.totalorder %s192, 0
      %s195 = sadd.s32 %s194, 1
      %s196 = scalar_select %p193, %s194, %s195
      %p199 = pneg %p193
      %p200 = scmp.eq.s32.totalorder %s16, 1
      %p201 = por %p199, %p200
      %p202 = scmp.ne.s32.totalorder %s194, %s197
      %p203 = scmp.eq.s32.totalorder %s16, 0
      %p204 = por %p202, %p203
      %p205 = scmp.ne.s32.totalorder %s194, %s197
      %p206 = scmp.eq.s32.totalorder %s21, 1
      %p207 = por %p205, %p206
      %p208 = scmp.ne.s32.totalorder %s197, %s198
      %p209 = scmp.eq.s32.totalorder %s21, 0
      %p210 = por %p208, %p209
      %p211 = scmp.ne.s32.totalorder %s197, %s198
      %p212 = scmp.eq.s32.totalorder %s22, 1
      %p213 = por %p211, %p212
      %p215 = scmp.ne.s32.totalorder %s198, %s214
      %p216 = scmp.eq.s32.totalorder %s22, 0
      %p217 = por %p215, %p216
      %p218 = scmp.le.s32.totalorder 1, %s16
      %p219 = scmp.lt.s32.totalorder %s16, 3
      %p220 = pnand %p218, %p219
      %p221 = pneg %p220
      // Predicated region
      $region9: #{tpu_custom_call.1} parent=5 // pred_check
        _
      $region10: #{tpu_custom_call.1} parent=5 // pred_check_branch
        %223 = sbr.rel (%p220) target = $region12
      $region11: #{tpu_custom_call.1} parent=5 // pred_region
        %s224 = ssub.s32 %s16, 1
        // Predicated region
        $region13: #{tpu_custom_call.1} parent=11 // pred_check
          %p225 = pneg %p77
        $region14: #{tpu_custom_call.1} parent=11 // pred_check_branch
          %227 = sbr.rel (%p225) target = $region16
        $region15: #{tpu_custom_call.1} parent=11 // pred_region
          _
        $region16: #{tpu_custom_call.1} parent=11 // pred_fallthru
          _
        // Predicated region
        $region17: #{tpu_custom_call.1} parent=11 // pred_check
          %p228 = pneg %p98
        $region18: #{tpu_custom_call.1} parent=11 // pred_check_branch
          %230 = sbr.rel (%p228) target = $region20
        $region19: #{tpu_custom_call.1} parent=11 // pred_region
          _
        $region20: #{tpu_custom_call.1} parent=11 // pred_fallthru
          _
        // Predicated region
        $region21: #{tpu_custom_call.1} parent=11 // pred_check
          %p231 = pneg %p119
        $region22: #{tpu_custom_call.1} parent=11 // pred_check_branch
          %233 = sbr.rel (%p231) target = $region24
        $region23: #{tpu_custom_call.1} parent=11 // pred_region
          _
        $region24: #{tpu_custom_call.1} parent=11 // pred_fallthru
          _
        // Predicated region
        $region25: #{tpu_custom_call.1} parent=11 // pred_check
          %p234 = pneg %p140
        $region26: #{tpu_custom_call.1} parent=11 // pred_check_branch
          %236 = sbr.rel (%p234) target = $region28
        $region27: #{tpu_custom_call.1} parent=11 // pred_region
          _
        $region28: #{tpu_custom_call.1} parent=11 // pred_fallthru
          _
        // Predicated region
        $region29: #{tpu_custom_call.1} parent=11 // pred_check
          %p237 = pneg %p161
        $region30: #{tpu_custom_call.1} parent=11 // pred_check_branch
          %239 = sbr.rel (%p237) target = $region32
        $region31: #{tpu_custom_call.1} parent=11 // pred_region
          _
        $region32: #{tpu_custom_call.1} parent=11 // pred_fallthru
          _
        // Predicated region
        $region33: #{tpu_custom_call.1} parent=11 // pred_check
          %p240 = pneg %p182
        $region34: #{tpu_custom_call.1} parent=11 // pred_check_branch
          %242 = sbr.rel (%p240) target = $region36
        $region35: #{tpu_custom_call.1} parent=11 // pred_region
          _
        $region36: #{tpu_custom_call.1} parent=11 // pred_fallthru
          _
      $region12: #{tpu_custom_call.1} parent=5 // pred_fallthru
        _
      %p243 = scmp.lt.s32.totalorder %s16, 2
      // Predicated region
      $region37: #{tpu_custom_call.1} parent=5 // pred_check
        %p244 = pneg %p243
      $region38: #{tpu_custom_call.1} parent=5 // pred_check_branch
        %246 = sbr.rel (%p244) target = $region40
      $region39: #{tpu_custom_call.1} parent=5 // pred_region
        // Predicated region
        $region41: #{tpu_custom_call.1} parent=39 // pred_check
          %p247 = pneg %p50
        $region42: #{tpu_custom_call.1} parent=39 // pred_check_branch
          %249 = sbr.rel (%p247) target = $region44
        $region43: #{tpu_custom_call.1} parent=39 // pred_region
          %s250 = smul.u32 8, %s24
          %p251 = scmp.lt.s32.totalorder %s23, 1
          %s252 = scalar_select %p251, %s23, 1
          %p253 = scmp.lt.s32.totalorder %s250, 7
          %s254 = scalar_select %p253, %s250, 7
          %s255 = smul.addr %s252, 128
          %s256 = sadd.s32 %s254, %s255
          %s257 = smul.addr %s256, 4
          %s258 = scalar_lea.vmem %s0, %s257
          %s259 = smul.u32 8, %s24
        $region44: #{tpu_custom_call.1} parent=39 // pred_fallthru
          _
      $region40: #{tpu_custom_call.1} parent=5 // pred_fallthru
        _
      %p260 = scmp.le.s32.totalorder 1, %s16
      %p261 = scmp.lt.s32.totalorder %s16, 3
      %p262 = pnand %p260, %p261
      %p263 = pneg %p262
      // Predicated region
      $region45: #{tpu_custom_call.1} parent=5 // pred_check
        _
      $region46: #{tpu_custom_call.1} parent=5 // pred_check_branch
        %265 = sbr.rel (%p262) target = $region48
      $region47: #{tpu_custom_call.1} parent=5 // pred_region
        %s266 = ssub.s32 %s16, 1
        %s267 = smul.u32 8, %s26
        %p268 = scmp.lt.s32.totalorder %s25, 1
        %s269 = scalar_select %p268, %s25, 1
        %p270 = scmp.lt.s32.totalorder %s267, 7
        %s271 = scalar_select %p270, %s267, 7
        %s272 = smul.addr %s269, 128
        %s273 = sadd.s32 %s271, %s272
        %s274 = smul.addr %s273, 4
        %s275 = scalar_lea.vmem %s0, %s274
        %p276 = pneg %p56
        %p277 = pneg %p53
        %p278 = pneg %p77
        %p279 = pneg %p74
        %p280 = pneg %p98
        %p281 = pneg %p95
        %p282 = pneg %p119
        %p283 = pneg %p116
        %p284 = pneg %p140
        %p285 = pneg %p137
        %p286 = pneg %p161
        %p287 = pneg %p158
        %p288 = pneg %p182
        %p289 = pneg %p179
        %p290 = pneg %p210
        %p291 = pneg %p207
        %s292 = sand.u32 %s197, 1
        %s293 = scalar_lea.sflag [#allocation3], %s292
        %s294 = sand.u32 %s197, 1
        %s295 = smul.addr %s294, 128
        %s296 = scalar_lea.vmem [#allocation2], %s295
        %s297 = smul.u32 8, %s26
        %p298 = scmp.lt.s32.totalorder %s25, 1
        %s299 = scalar_select %p298, %s25, 1
        %p300 = scmp.lt.s32.totalorder %s297, 7
        %s301 = scalar_select %p300, %s297, 7
        %s302 = smul.addr %s299, 128
        %s303 = sadd.s32 %s301, %s302
        %s304 = smul.addr %s303, 4
        %s305 = scalar_lea.vmem %s0, %s304
        %s306 = smul.u32 8, %s26
        %s307 = smul.u32 8, %s26
        %v309 = vld [vmem:[%s305] sm:$0xff]
        %v310 = vld [vmem:[%s305 + $0x8] sm:$0xff]
        %v311 = vld [vmem:[%s305 + $0x10] sm:$0xff]
        %v312 = vld [vmem:[%s305 + $0x18] sm:$0xff]
        %v313 = vld [vmem:[%s305 + $0x20] sm:$0xff]
        %v314 = vld [vmem:[%s305 + $0x28] sm:$0xff]
        %v315 = vld [vmem:[%s305 + $0x30] sm:$0xff]
        %v316 = vld [vmem:[%s305 + $0x38] sm:$0xff]
        %v317 = vld [vmem:[%s305 + $0x40] sm:$0xff]
        %v318 = vld [vmem:[%s305 + $0x48] sm:$0xff]
        %v319 = vld [vmem:[%s305 + $0x50] sm:$0xff]
        %v320 = vld [vmem:[%s305 + $0x58] sm:$0xff]
        %v321 = vld [vmem:[%s305 + $0x60] sm:$0xff]
        %v322 = vld [vmem:[%s305 + $0x68] sm:$0xff]
        %v323 = vld [vmem:[%s305 + $0x70] sm:$0xff]
        %v324 = vld [vmem:[%s305 + $0x78] sm:$0xff]
        %v325 = vld [vmem:[%s305 + $0x80] sm:$0xff]
        %v326 = vld [vmem:[%s305 + $0x88] sm:$0xff]
        %v327 = vld [vmem:[%s305 + $0x90] sm:$0xff]
        %v328 = vld [vmem:[%s305 + $0x98] sm:$0xff]
        %v329 = vld [vmem:[%s305 + $0xa0] sm:$0xff]
        %v330 = vld [vmem:[%s305 + $0xa8] sm:$0xff]
        %v331 = vld [vmem:[%s305 + $0xb0] sm:$0xff]
        %v332 = vld [vmem:[%s305 + $0xb8] sm:$0xff]
        %v333 = vld [vmem:[%s305 + $0xc0] sm:$0xff]
        %v334 = vld [vmem:[%s305 + $0xc8] sm:$0xff]
        %v335 = vld [vmem:[%s305 + $0xd0] sm:$0xff]
        %v336 = vld [vmem:[%s305 + $0xd8] sm:$0xff]
        %v337 = vld [vmem:[%s305 + $0xe0] sm:$0xff]
        %v338 = vld [vmem:[%s305 + $0xe8] sm:$0xff]
        %v339 = vld [vmem:[%s305 + $0xf0] sm:$0xff]
        %v340 = vld [vmem:[%s305 + $0xf8] sm:$0xff]
        %v341 = vld [vmem:[%s305 + $0x100] sm:$0xff]
        %v342 = vld [vmem:[%s305 + $0x108] sm:$0xff]
        %v343 = vld [vmem:[%s305 + $0x110] sm:$0xff]
        %v344 = vld [vmem:[%s305 + $0x118] sm:$0xff]
        %v345 = vld [vmem:[%s305 + $0x120] sm:$0xff]
        %v346 = vld [vmem:[%s305 + $0x128] sm:$0xff]
        %v347 = vld [vmem:[%s305 + $0x130] sm:$0xff]
        %v348 = vld [vmem:[%s305 + $0x138] sm:$0xff]
        %v349 = vld [vmem:[%s305 + $0x140] sm:$0xff]
        %v350 = vld [vmem:[%s305 + $0x148] sm:$0xff]
        %v351 = vld [vmem:[%s305 + $0x150] sm:$0xff]
        %v352 = vld [vmem:[%s305 + $0x158] sm:$0xff]
        %v353 = vld [vmem:[%s305 + $0x160] sm:$0xff]
        %v354 = vld [vmem:[%s305 + $0x168] sm:$0xff]
        %v355 = vld [vmem:[%s305 + $0x170] sm:$0xff]
        %v356 = vld [vmem:[%s305 + $0x178] sm:$0xff]
        %v357 = vld [vmem:[%s305 + $0x180] sm:$0xff]
        %v358 = vld [vmem:[%s305 + $0x188] sm:$0xff]
        %v359 = vld [vmem:[%s305 + $0x190] sm:$0xff]
        %v360 = vld [vmem:[%s305 + $0x198] sm:$0xff]
        %v361 = vld [vmem:[%s305 + $0x1a0] sm:$0xff]
        %v362 = vld [vmem:[%s305 + $0x1a8] sm:$0xff]
        %v363 = vld [vmem:[%s305 + $0x1b0] sm:$0xff]
        %v364 = vld [vmem:[%s305 + $0x1b8] sm:$0xff]
        %v365 = vld [vmem:[%s305 + $0x1c0] sm:$0xff]
        %v366 = vld [vmem:[%s305 + $0x1c8] sm:$0xff]
        %v367 = vld [vmem:[%s305 + $0x1d0] sm:$0xff]
        %v368 = vld [vmem:[%s305 + $0x1d8] sm:$0xff]
        %v369 = vld [vmem:[%s305 + $0x1e0] sm:$0xff]
        %v370 = vld [vmem:[%s305 + $0x1e8] sm:$0xff]
        %v371 = vld [vmem:[%s305 + $0x1f0] sm:$0xff]
        %v372 = vld [vmem:[%s305 + $0x1f8] sm:$0xff]
        %v373 = vld [vmem:[%s1] sm:$0xf]
        %v374 = vld [vmem:[%s1 + $0x4] sm:$0xf]
        %v375 = vld [vmem:[%s1 + $0x8] sm:$0xf]
        %v376 = vld [vmem:[%s1 + $0xc] sm:$0xf]
        %v377 = vld [vmem:[%s1 + $0x10] sm:$0xf]
        %v378 = vld [vmem:[%s1 + $0x14] sm:$0xf]
        %v379 = vld [vmem:[%s1 + $0x18] sm:$0xf]
        %v380 = vld [vmem:[%s1 + $0x1c] sm:$0xf]
        %v381 = vld [vmem:[%s1 + $0x20] sm:$0xf]
        %v382 = vld [vmem:[%s1 + $0x24] sm:$0xf]
        %v383 = vld [vmem:[%s1 + $0x28] sm:$0xf]
        %v384 = vld [vmem:[%s1 + $0x2c] sm:$0xf]
        %v385 = vld [vmem:[%s1 + $0x30] sm:$0xf]
        %v386 = vld [vmem:[%s1 + $0x34] sm:$0xf]
        %v387 = vld [vmem:[%s1 + $0x38] sm:$0xf]
        %v388 = vld [vmem:[%s1 + $0x3c] sm:$0xf]
        %v389 = vld [vmem:[%s2] sm:$0xff]
        %v390 = vld [vmem:[%s2 + $0x8] sm:$0xff]
        %v391 = vld [vmem:[%s2 + $0x10] sm:$0xff]
        %v392 = vld [vmem:[%s2 + $0x18] sm:$0xff]
        %v393 = vld [vmem:[%s2 + $0x20] sm:$0xff]
        %v394 = vld [vmem:[%s2 + $0x28] sm:$0xff]
        %v395 = vld [vmem:[%s2 + $0x30] sm:$0xff]
        %v396 = vld [vmem:[%s2 + $0x38] sm:$0xff]
        %v397 = vld [vmem:[%s2 + $0x40] sm:$0xff]
        %v398 = vld [vmem:[%s2 + $0x48] sm:$0xff]
        %v399 = vld [vmem:[%s2 + $0x50] sm:$0xff]
        %v400 = vld [vmem:[%s2 + $0x58] sm:$0xff]
        %v401 = vld [vmem:[%s2 + $0x60] sm:$0xff]
        %v402 = vld [vmem:[%s2 + $0x68] sm:$0xff]
        %v403 = vld [vmem:[%s2 + $0x70] sm:$0xff]
        %v404 = vld [vmem:[%s2 + $0x78] sm:$0xff]
        %406 = vset.pattern.permute.xlu0 0
        %407 = vperm.xlu0 %406, %v389
        %v408 = vpop.permute.xlu0 %407
        %411 = vset.pattern.permute.xlu0 0
        %412 = vperm.xlu0 %411, %v390
        %v413 = vpop.permute.xlu0 %412
        %416 = vset.pattern.permute.xlu0 0
        %417 = vperm.xlu0 %416, %v391
        %v418 = vpop.permute.xlu0 %417
        %421 = vset.pattern.permute.xlu0 0
        %422 = vperm.xlu0 %421, %v392
        %v423 = vpop.permute.xlu0 %422
        %426 = vset.pattern.permute.xlu0 0
        %427 = vperm.xlu0 %426, %v393
        %v428 = vpop.permute.xlu0 %427
        %431 = vset.pattern.permute.xlu0 0
        %432 = vperm.xlu0 %431, %v394
        %v433 = vpop.permute.xlu0 %432
        %436 = vset.pattern.permute.xlu0 0
        %437 = vperm.xlu0 %436, %v395
        %v438 = vpop.permute.xlu0 %437
        %441 = vset.pattern.permute.xlu0 0
        %442 = vperm.xlu0 %441, %v396
        %v443 = vpop.permute.xlu0 %442
        %446 = vset.pattern.permute.xlu0 0
        %447 = vperm.xlu0 %446, %v397
        %v448 = vpop.permute.xlu0 %447
        %451 = vset.pattern.permute.xlu0 0
        %452 = vperm.xlu0 %451, %v398
        %v453 = vpop.permute.xlu0 %452
        %456 = vset.pattern.permute.xlu0 0
        %457 = vperm.xlu0 %456, %v399
        %v458 = vpop.permute.xlu0 %457
        %461 = vset.pattern.permute.xlu0 0
        %462 = vperm.xlu0 %461, %v400
        %v463 = vpop.permute.xlu0 %462
        %466 = vset.pattern.permute.xlu0 0
        %467 = vperm.xlu0 %466, %v401
        %v468 = vpop.permute.xlu0 %467
        %471 = vset.pattern.permute.xlu0 0
        %472 = vperm.xlu0 %471, %v402
        %v473 = vpop.permute.xlu0 %472
        %476 = vset.pattern.permute.xlu0 0
        %477 = vperm.xlu0 %476, %v403
        %v478 = vpop.permute.xlu0 %477
        %481 = vset.pattern.permute.xlu0 0
        %482 = vperm.xlu0 %481, %v404
        %v483 = vpop.permute.xlu0 %482
        %v501 = vunpack.c.l.b16 %v373
        %v502 = vunpack.c.l.b16 %v374
        %v503 = vunpack.c.l.b16 %v375
        %v504 = vunpack.c.l.b16 %v376
        %v505 = vunpack.c.l.b16 %v377
        %v506 = vunpack.c.l.b16 %v378
        %v507 = vunpack.c.l.b16 %v379
        %v508 = vunpack.c.l.b16 %v380
        %v509 = vunpack.c.l.b16 %v381
        %v510 = vunpack.c.l.b16 %v382
        %v511 = vunpack.c.l.b16 %v383
        %v512 = vunpack.c.l.b16 %v384
        %v513 = vunpack.c.l.b16 %v385
        %v514 = vunpack.c.l.b16 %v386
        %v515 = vunpack.c.l.b16 %v387
        %v516 = vunpack.c.l.b16 %v388
        %v517 = vpack.c.b16 %v502, %v501
        %v518 = vpack.c.b16 %v504, %v503
        %v519 = vpack.c.b16 %v506, %v505
        %v520 = vpack.c.b16 %v508, %v507
        %v521 = vpack.c.b16 %v510, %v509
        %v522 = vpack.c.b16 %v512, %v511
        %v523 = vpack.c.b16 %v514, %v513
        %v524 = vpack.c.b16 %v516, %v515
        %v597 = vunpack.c.l.b16 %v309
        %v598 = vunpack.c.h.b16 %v309
        %v599 = vunpack.c.l.b16 %v310
        %v600 = vunpack.c.h.b16 %v310
        %v601 = vunpack.c.l.b16 %v311
        %v602 = vunpack.c.h.b16 %v311
        %v603 = vunpack.c.l.b16 %v312
        %v604 = vunpack.c.h.b16 %v312
        %v605 = vunpack.c.l.b16 %v313
        %v606 = vunpack.c.h.b16 %v313
        %v607 = vunpack.c.l.b16 %v314
        %v608 = vunpack.c.h.b16 %v314
        %v609 = vunpack.c.l.b16 %v315
        %v610 = vunpack.c.h.b16 %v315
        %v611 = vunpack.c.l.b16 %v316
        %v612 = vunpack.c.h.b16 %v316
        %v613 = vunpack.c.l.b16 %v317
        %v614 = vunpack.c.h.b16 %v317
        %v615 = vunpack.c.l.b16 %v318
        %v616 = vunpack.c.h.b16 %v318
        %v617 = vunpack.c.l.b16 %v319
        %v618 = vunpack.c.h.b16 %v319
        %v619 = vunpack.c.l.b16 %v320
        %v620 = vunpack.c.h.b16 %v320
        %v621 = vunpack.c.l.b16 %v321
        %v622 = vunpack.c.h.b16 %v321
        %v623 = vunpack.c.l.b16 %v322
        %v624 = vunpack.c.h.b16 %v322
        %v625 = vunpack.c.l.b16 %v323
        %v626 = vunpack.c.h.b16 %v323
        %v627 = vunpack.c.l.b16 %v324
        %v628 = vunpack.c.h.b16 %v324
        %v629 = vunpack.c.l.b16 %v325
        %v630 = vunpack.c.h.b16 %v325
        %v631 = vunpack.c.l.b16 %v326
        %v632 = vunpack.c.h.b16 %v326
        %v633 = vunpack.c.l.b16 %v327
        %v634 = vunpack.c.h.b16 %v327
        %v635 = vunpack.c.l.b16 %v328
        %v636 = vunpack.c.h.b16 %v328
        %v637 = vunpack.c.l.b16 %v329
        %v638 = vunpack.c.h.b16 %v329
        %v639 = vunpack.c.l.b16 %v330
        %v640 = vunpack.c.h.b16 %v330
        %v641 = vunpack.c.l.b16 %v331
        %v642 = vunpack.c.h.b16 %v331
        %v643 = vunpack.c.l.b16 %v332
        %v644 = vunpack.c.h.b16 %v332
        %v645 = vunpack.c.l.b16 %v333
        %v646 = vunpack.c.h.b16 %v333
        %v647 = vunpack.c.l.b16 %v334
        %v648 = vunpack.c.h.b16 %v334
        %v649 = vunpack.c.l.b16 %v335
        %v650 = vunpack.c.h.b16 %v335
        %v651 = vunpack.c.l.b16 %v336
        %v652 = vunpack.c.h.b16 %v336
        %v653 = vunpack.c.l.b16 %v337
        %v654 = vunpack.c.h.b16 %v337
        %v655 = vunpack.c.l.b16 %v338
        %v656 = vunpack.c.h.b16 %v338
        %v657 = vunpack.c.l.b16 %v339
        %v658 = vunpack.c.h.b16 %v339
        %v659 = vunpack.c.l.b16 %v340
        %v660 = vunpack.c.h.b16 %v340
        %v661 = vunpack.c.l.b16 %v341
        %v662 = vunpack.c.h.b16 %v341
        %v663 = vunpack.c.l.b16 %v342
        %v664 = vunpack.c.h.b16 %v342
        %v665 = vunpack.c.l.b16 %v343
        %v666 = vunpack.c.h.b16 %v343
        %v667 = vunpack.c.l.b16 %v344
        %v668 = vunpack.c.h.b16 %v344
        %v669 = vunpack.c.l.b16 %v345
        %v670 = vunpack.c.h.b16 %v345
        %v671 = vunpack.c.l.b16 %v346
        %v672 = vunpack.c.h.b16 %v346
        %v673 = vunpack.c.l.b16 %v347
        %v674 = vunpack.c.h.b16 %v347
        %v675 = vunpack.c.l.b16 %v348
        %v676 = vunpack.c.h.b16 %v348
        %v677 = vunpack.c.l.b16 %v349
        %v678 = vunpack.c.h.b16 %v349
        %v679 = vunpack.c.l.b16 %v350
        %v680 = vunpack.c.h.b16 %v350
        %v681 = vunpack.c.l.b16 %v351
        %v682 = vunpack.c.h.b16 %v351
        %v683 = vunpack.c.l.b16 %v352
        %v684 = vunpack.c.h.b16 %v352
        %v685 = vunpack.c.l.b16 %v353
        %v686 = vunpack.c.h.b16 %v353
        %v687 = vunpack.c.l.b16 %v354
        %v688 = vunpack.c.h.b16 %v354
        %v689 = vunpack.c.l.b16 %v355
        %v690 = vunpack.c.h.b16 %v355
        %v691 = vunpack.c.l.b16 %v356
        %v692 = vunpack.c.h.b16 %v356
        %v693 = vunpack.c.l.b16 %v357
        %v694 = vunpack.c.h.b16 %v357
        %v695 = vunpack.c.l.b16 %v358
        %v696 = vunpack.c.h.b16 %v358
        %v697 = vunpack.c.l.b16 %v359
        %v698 = vunpack.c.h.b16 %v359
        %v699 = vunpack.c.l.b16 %v360
        %v700 = vunpack.c.h.b16 %v360
        %v701 = vunpack.c.l.b16 %v361
        %v702 = vunpack.c.h.b16 %v361
        %v703 = vunpack.c.l.b16 %v362
        %v704 = vunpack.c.h.b16 %v362
        %v705 = vunpack.c.l.b16 %v363
        %v706 = vunpack.c.h.b16 %v363
        %v707 = vunpack.c.l.b16 %v364
        %v708 = vunpack.c.h.b16 %v364
        %v709 = vunpack.c.l.b16 %v365
        %v710 = vunpack.c.h.b16 %v365
        %v711 = vunpack.c.l.b16 %v366
        %v712 = vunpack.c.h.b16 %v366
        %v713 = vunpack.c.l.b16 %v367
        %v714 = vunpack.c.h.b16 %v367
        %v715 = vunpack.c.l.b16 %v368
        %v716 = vunpack.c.h.b16 %v368
        %v717 = vunpack.c.l.b16 %v369
        %v718 = vunpack.c.h.b16 %v369
        %v719 = vunpack.c.l.b16 %v370
        %v720 = vunpack.c.h.b16 %v370
        %v721 = vunpack.c.l.b16 %v371
        %v722 = vunpack.c.h.b16 %v371
        %v723 = vunpack.c.l.b16 %v372
        %v724 = vunpack.c.h.b16 %v372
        %v725 = vpack.c.b16 %v605, %v597
        %v726 = vpack.c.b16 %v606, %v598
        %v727 = vpack.c.b16 %v607, %v599
        %v728 = vpack.c.b16 %v608, %v600
        %v729 = vpack.c.b16 %v609, %v601
        %v730 = vpack.c.b16 %v610, %v602
        %v731 = vpack.c.b16 %v611, %v603
        %v732 = vpack.c.b16 %v612, %v604
        %v733 = vpack.c.b16 %v621, %v613
        %v734 = vpack.c.b16 %v622, %v614
        %v735 = vpack.c.b16 %v623, %v615
        %v736 = vpack.c.b16 %v624, %v616
        %v737 = vpack.c.b16 %v625, %v617
        %v738 = vpack.c.b16 %v626, %v618
        %v739 = vpack.c.b16 %v627, %v619
        %v740 = vpack.c.b16 %v628, %v620
        %v741 = vpack.c.b16 %v637, %v629
        %v742 = vpack.c.b16 %v638, %v630
        %v743 = vpack.c.b16 %v639, %v631
        %v744 = vpack.c.b16 %v640, %v632
        %v745 = vpack.c.b16 %v641, %v633
        %v746 = vpack.c.b16 %v642, %v634
        %v747 = vpack.c.b16 %v643, %v635
        %v748 = vpack.c.b16 %v644, %v636
        %v749 = vpack.c.b16 %v653, %v645
        %v750 = vpack.c.b16 %v654, %v646
        %v751 = vpack.c.b16 %v655, %v647
        %v752 = vpack.c.b16 %v656, %v648
        %v753 = vpack.c.b16 %v657, %v649
        %v754 = vpack.c.b16 %v658, %v650
        %v755 = vpack.c.b16 %v659, %v651
        %v756 = vpack.c.b16 %v660, %v652
        %v757 = vpack.c.b16 %v669, %v661
        %v758 = vpack.c.b16 %v670, %v662
        %v759 = vpack.c.b16 %v671, %v663
        %v760 = vpack.c.b16 %v672, %v664
        %v761 = vpack.c.b16 %v673, %v665
        %v762 = vpack.c.b16 %v674, %v666
        %v763 = vpack.c.b16 %v675, %v667
        %v764 = vpack.c.b16 %v676, %v668
        %v765 = vpack.c.b16 %v685, %v677
        %v766 = vpack.c.b16 %v686, %v678
        %v767 = vpack.c.b16 %v687, %v679
        %v768 = vpack.c.b16 %v688, %v680
        %v769 = vpack.c.b16 %v689, %v681
        %v770 = vpack.c.b16 %v690, %v682
        %v771 = vpack.c.b16 %v691, %v683
        %v772 = vpack.c.b16 %v692, %v684
        %v773 = vpack.c.b16 %v701, %v693
        %v774 = vpack.c.b16 %v702, %v694
        %v775 = vpack.c.b16 %v703, %v695
        %v776 = vpack.c.b16 %v704, %v696
        %v777 = vpack.c.b16 %v705, %v697
        %v778 = vpack.c.b16 %v706, %v698
        %v779 = vpack.c.b16 %v707, %v699
        %v780 = vpack.c.b16 %v708, %v700
        %v781 = vpack.c.b16 %v717, %v709
        %v782 = vpack.c.b16 %v718, %v710
        %v783 = vpack.c.b16 %v719, %v711
        %v784 = vpack.c.b16 %v720, %v712
        %v785 = vpack.c.b16 %v721, %v713
        %v786 = vpack.c.b16 %v722, %v714
        %v787 = vpack.c.b16 %v723, %v715
        %v788 = vpack.c.b16 %v724, %v716
        %853 = vmatprep.subr.bf16.mxu0 %v726
        %854 = vmatpush1.bf16.msra.mxu0 %v725
        %855 = vmatprep.subr.bf16.mxu0 %v734
        %856 = vmatpush1.bf16.msra.mxu0 %v733
        %857 = vmatprep.subr.bf16.mxu0 %v742
        %858 = vmatpush1.bf16.msra.mxu0 %v741
        %859 = vmatprep.subr.bf16.mxu0 %v750
        %860 = vmatpush1.bf16.msra.mxu0 %v749
        %861 = vmatprep.subr.bf16.mxu0 %v758
        %862 = vmatpush1.bf16.msra.mxu0 %v757
        %863 = vmatprep.subr.bf16.mxu0 %v766
        %864 = vmatpush1.bf16.msra.mxu0 %v765
        %865 = vmatprep.subr.bf16.mxu0 %v774
        %866 = vmatpush1.bf16.msra.mxu0 %v773
        %867 = vmatprep.subr.bf16.mxu0 %v782
        %868 = vmatpush1.bf16.msra.mxu0 %v781
        %869 = vmatprep.subr.bf16.mxu0 0
        %870 = vmatpush1.bf16.msra.mxu0 0
        %871 = vmatprep.subr.bf16.mxu0 0
        %872 = vmatpush1.bf16.msra.mxu0 0
        %873 = vmatprep.subr.bf16.mxu0 0
        %874 = vmatpush1.bf16.msra.mxu0 0
        %875 = vmatprep.subr.bf16.mxu0 0
        %876 = vmatpush1.bf16.msra.mxu0 0
        %877 = vmatprep.subr.bf16.mxu0 0
        %878 = vmatpush1.bf16.msra.mxu0 0
        %879 = vmatprep.subr.bf16.mxu0 0
        %880 = vmatpush1.bf16.msra.mxu0 0
        %881 = vmatprep.subr.bf16.mxu0 0
        %882 = vmatpush1.bf16.msra.mxu0 0
        %883 = vmatprep.subr.bf16.mxu0 0
        %884 = vmatpush1.bf16.msra.mxu0 0
        %885 = vmatprep.mubr.bf16.mxu0 0
        %886 = vmatmul.mubr.bf16.gmra.mrb[0].mxu0 %v517
        %v887 = vpop.f32.mrb[0].mxu0
        %v888 = vadd.f32 %v408, %v887
        %v889 = vpop.f32.mrb[0].mxu0
        %v890 = vadd.f32 %v408, %v889
        %v891 = vpop.f32.mrb[0].mxu0
        %v892 = vadd.f32 %v413, %v891
        %v893 = vpop.f32.mrb[0].mxu0
        %v894 = vadd.f32 %v413, %v893
        %895 = vmatprep.mubr.bf16.mxu0 0
        %896 = vmatmul.mubr.bf16.gmra.mrb[0].mxu0 %v518
        %v897 = vpop.f32.mrb[0].mxu0
        %v898 = vadd.f32 %v418, %v897
        %v899 = vpop.f32.mrb[0].mxu0
        %v900 = vadd.f32 %v418, %v899
        %v901 = vpop.f32.mrb[0].mxu0
        %v902 = vadd.f32 %v423, %v901
        %v903 = vpop.f32.mrb[0].mxu0
        %v904 = vadd.f32 %v423, %v903
        %905 = vmatprep.mubr.bf16.mxu0 0
        %906 = vmatmul.mubr.bf16.gmra.mrb[0].mxu0 %v519
        %v907 = vpop.f32.mrb[0].mxu0
        %v908 = vadd.f32 %v428, %v907
        %v909 = vpop.f32.mrb[0].mxu0
        %v910 = vadd.f32 %v428, %v909
        %v911 = vpop.f32.mrb[0].mxu0
        %v912 = vadd.f32 %v433, %v911
        %v913 = vpop.f32.mrb[0].mxu0
        %v914 = vadd.f32 %v433, %v913
        %915 = vmatprep.mubr.bf16.mxu0 0
        %916 = vmatmul.mubr.bf16.gmra.mrb[0].mxu0 %v520
        %v917 = vpop.f32.mrb[0].mxu0
        %v918 = vadd.f32 %v438, %v917
        %v919 = vpop.f32.mrb[0].mxu0
        %v920 = vadd.f32 %v438, %v919
        %v921 = vpop.f32.mrb[0].mxu0
        %v922 = vadd.f32 %v443, %v921
        %v923 = vpop.f32.mrb[0].mxu0
        %v924 = vadd.f32 %v443, %v923
        %925 = vmatprep.mubr.bf16.mxu0 0
        %926 = vmatmul.mubr.bf16.gmra.mrb[0].mxu0 %v521
        %v927 = vpop.f32.mrb[0].mxu0
        %v928 = vadd.f32 %v448, %v927
        %v929 = vpop.f32.mrb[0].mxu0
        %v930 = vadd.f32 %v448, %v929
        %v931 = vpop.f32.mrb[0].mxu0
        %v932 = vadd.f32 %v453, %v931
        %v933 = vpop.f32.mrb[0].mxu0
        %v934 = vadd.f32 %v453, %v933
        %935 = vmatprep.mubr.bf16.mxu0 0
        %936 = vmatmul.mubr.bf16.gmra.mrb[0].mxu0 %v522
        %v937 = vpop.f32.mrb[0].mxu0
        %v938 = vadd.f32 %v458, %v937
        %v939 = vpop.f32.mrb[0].mxu0
        %v940 = vadd.f32 %v458, %v939
        %v941 = vpop.f32.mrb[0].mxu0
        %v942 = vadd.f32 %v463, %v941
        %v943 = vpop.f32.mrb[0].mxu0
        %v944 = vadd.f32 %v463, %v943
        %945 = vmatprep.mubr.bf16.mxu0 0
        %946 = vmatmul.mubr.bf16.gmra.mrb[0].mxu0 %v523
        %v947 = vpop.f32.mrb[0].mxu0
        %v948 = vadd.f32 %v468, %v947
        %v949 = vpop.f32.mrb[0].mxu0
        %v950 = vadd.f32 %v468, %v949
        %v951 = vpop.f32.mrb[0].mxu0
        %v952 = vadd.f32 %v473, %v951
        %v953 = vpop.f32.mrb[0].mxu0
        %v954 = vadd.f32 %v473, %v953
        %955 = vmatprep.mubr.bf16.mxu0 0
        %956 = vmatmul.mubr.bf16.gmra.mrb[0].mxu0 %v524
        %v957 = vpop.f32.mrb[0].mxu0
        %v958 = vadd.f32 %v478, %v957
        %v959 = vpop.f32.mrb[0].mxu0
        %v960 = vadd.f32 %v478, %v959
        %v961 = vpop.f32.mrb[0].mxu0
        %v962 = vadd.f32 %v483, %v961
        %v963 = vpop.f32.mrb[0].mxu0
        %v964 = vadd.f32 %v483, %v963
        %965 = vdwg.mxu0
        %966 = vmatprep.subr.bf16.mxu0 %v728
        %967 = vmatpush1.bf16.msra.mxu0 %v727
        %968 = vmatprep.subr.bf16.mxu0 %v736
        %969 = vmatpush1.bf16.msra.mxu0 %v735
        %970 = vmatprep.subr.bf16.mxu0 %v744
        %971 = vmatpush1.bf16.msra.mxu0 %v743
        %972 = vmatprep.subr.bf16.mxu0 %v752
        %973 = vmatpush1.bf16.msra.mxu0 %v751
        %974 = vmatprep.subr.bf16.mxu0 %v760
        %975 = vmatpush1.bf16.msra.mxu0 %v759
        %976 = vmatprep.subr.bf16.mxu0 %v768
        %977 = vmatpush1.bf16.msra.mxu0 %v767
        %978 = vmatprep.subr.bf16.mxu0 %v776
        %979 = vmatpush1.bf16.msra.mxu0 %v775
        %980 = vmatprep.subr.bf16.mxu0 %v784
        %981 = vmatpush1.bf16.msra.mxu0 %v783
        %982 = vmatprep.subr.bf16.mxu0 0
        %983 = vmatpush1.bf16.msra.mxu0 0
        %984 = vmatprep.subr.bf16.mxu0 0
        %985 = vmatpush1.bf16.msra.mxu0 0
        %986 = vmatprep.subr.bf16.mxu0 0
        %987 = vmatpush1.bf16.msra.mxu0 0
        %988 = vmatprep.subr.bf16.mxu0 0
        %989 = vmatpush1.bf16.msra.mxu0 0
        %990 = vmatprep.subr.bf16.mxu0 0
        %991 = vmatpush1.bf16.msra.mxu0 0
        %992 = vmatprep.subr.bf16.mxu0 0
        %993 = vmatpush1.bf16.msra.mxu0 0
        %994 = vmatprep.subr.bf16.mxu0 0
        %995 = vmatpush1.bf16.msra.mxu0 0
        %996 = vmatprep.subr.bf16.mxu0 0
        %997 = vmatpush1.bf16.msra.mxu0 0
        %998 = vmatprep.mubr.bf16.mxu0 0
        %999 = vmatmul.mubr.bf16.gmra.mrb[0].mxu0 %v517
        %v1000 = vpop.f32.mrb[0].mxu0
        %v1001 = vadd.f32 %v408, %v1000
        %v1002 = vpop.f32.mrb[0].mxu0
        %v1003 = vadd.f32 %v408, %v1002
        %v1004 = vpop.f32.mrb[0].mxu0
        %v1005 = vadd.f32 %v413, %v1004
        %v1006 = vpop.f32.mrb[0].mxu0
        %v1007 = vadd.f32 %v413, %v1006
        %1008 = vmatprep.mubr.bf16.mxu0 0
        %1009 = vmatmul.mubr.bf16.gmra.mrb[0].mxu0 %v518
        %v1010 = vpop.f32.mrb[0].mxu0
        %v1011 = vadd.f32 %v418, %v1010
        %v1012 = vpop.f32.mrb[0].mxu0
        %v1013 = vadd.f32 %v418, %v1012
        %v1014 = vpop.f32.mrb[0].mxu0
        %v1015 = vadd.f32 %v423, %v1014
        %v1016 = vpop.f32.mrb[0].mxu0
        %v1017 = vadd.f32 %v423, %v1016
        %1018 = vmatprep.mubr.bf16.mxu0 0
        %1019 = vmatmul.mubr.bf16.gmra.mrb[0].mxu0 %v519
        %v1020 = vpop.f32.mrb[0].mxu0
        %v1021 = vadd.f32 %v428, %v1020
        %v1022 = vpop.f32.mrb[0].mxu0
        %v1023 = vadd.f32 %v428, %v1022
        %v1024 = vpop.f32.mrb[0].mxu0
        %v1025 = vadd.f32 %v433, %v1024
        %v1026 = vpop.f32.mrb[0].mxu0
        %v1027 = vadd.f32 %v433, %v1026
        %1028 = vmatprep.mubr.bf16.mxu0 0
        %1029 = vmatmul.mubr.bf16.gmra.mrb[0].mxu0 %v520
        %v1030 = vpop.f32.mrb[0].mxu0
        %v1031 = vadd.f32 %v438, %v1030
        %v1032 = vpop.f32.mrb[0].mxu0
        %v1033 = vadd.f32 %v438, %v1032
        %v1034 = vpop.f32.mrb[0].mxu0
        %v1035 = vadd.f32 %v443, %v1034
        %v1036 = vpop.f32.mrb[0].mxu0
        %v1037 = vadd.f32 %v443, %v1036
        %1038 = vmatprep.mubr.bf16.mxu0 0
        %1039 = vmatmul.mubr.bf16.gmra.mrb[0].mxu0 %v521
        %v1040 = vpop.f32.mrb[0].mxu0
        %v1041 = vadd.f32 %v448, %v1040
        %v1042 = vpop.f32.mrb[0].mxu0
        %v1043 = vadd.f32 %v448, %v1042
        %v1044 = vpop.f32.mrb[0].mxu0
        %v1045 = vadd.f32 %v453, %v1044
        %v1046 = vpop.f32.mrb[0].mxu0
        %v1047 = vadd.f32 %v453, %v1046
        %1048 = vmatprep.mubr.bf16.mxu0 0
        %1049 = vmatmul.mubr.bf16.gmra.mrb[0].mxu0 %v522
        %v1050 = vpop.f32.mrb[0].mxu0
        %v1051 = vadd.f32 %v458, %v1050
        %v1052 = vpop.f32.mrb[0].mxu0
        %v1053 = vadd.f32 %v458, %v1052
        %v1054 = vpop.f32.mrb[0].mxu0
        %v1055 = vadd.f32 %v463, %v1054
        %v1056 = vpop.f32.mrb[0].mxu0
        %v1057 = vadd.f32 %v463, %v1056
        %1058 = vmatprep.mubr.bf16.mxu0 0
        %1059 = vmatmul.mubr.bf16.gmra.mrb[0].mxu0 %v523
        %v1060 = vpop.f32.mrb[0].mxu0
        %v1061 = vadd.f32 %v468, %v1060
        %v1062 = vpop.f32.mrb[0].mxu0
        %v1063 = vadd.f32 %v468, %v1062
        %v1064 = vpop.f32.mrb[0].mxu0
        %v1065 = vadd.f32 %v473, %v1064
        %v1066 = vpop.f32.mrb[0].mxu0
        %v1067 = vadd.f32 %v473, %v1066
        %1068 = vmatprep.mubr.bf16.mxu0 0
        %1069 = vmatmul.mubr.bf16.gmra.mrb[0].mxu0 %v524
        %v1070 = vpop.f32.mrb[0].mxu0
        %v1071 = vadd.f32 %v478, %v1070
        %v1072 = vpop.f32.mrb[0].mxu0
        %v1073 = vadd.f32 %v478, %v1072
        %v1074 = vpop.f32.mrb[0].mxu0
        %v1075 = vadd.f32 %v483, %v1074
        %v1076 = vpop.f32.mrb[0].mxu0
        %v1077 = vadd.f32 %v483, %v1076
        %1078 = vdwg.mxu0
        %1079 = vmatprep.subr.bf16.mxu0 %v730
        %1080 = vmatpush1.bf16.msra.mxu0 %v729
        %1081 = vmatprep.subr.bf16.mxu0 %v738
        %1082 = vmatpush1.bf16.msra.mxu0 %v737
        %1083 = vmatprep.subr.bf16.mxu0 %v746
        %1084 = vmatpush1.bf16.msra.mxu0 %v745
        %1085 = vmatprep.subr.bf16.mxu0 %v754
        %1086 = vmatpush1.bf16.msra.mxu0 %v753
        %1087 = vmatprep.subr.bf16.mxu0 %v762
        %1088 = vmatpush1.bf16.msra.mxu0 %v761
        %1089 = vmatprep.subr.bf16.mxu0 %v770
        %1090 = vmatpush1.bf16.msra.mxu0 %v769
        %1091 = vmatprep.subr.bf16.mxu0 %v778
        %1092 = vmatpush1.bf16.msra.mxu0 %v777
        %1093 = vmatprep.subr.bf16.mxu0 %v786
        %1094 = vmatpush1.bf16.msra.mxu0 %v785
        %1095 = vmatprep.subr.bf16.mxu0 0
        %1096 = vmatpush1.bf16.msra.mxu0 0
        %1097 = vmatprep.subr.bf16.mxu0 0
        %1098 = vmatpush1.bf16.msra.mxu0 0
        %1099 = vmatprep.subr.bf16.mxu0 0
        %1100 = vmatpush1.bf16.msra.mxu0 0
        %1101 = vmatprep.subr.bf16.mxu0 0
        %1102 = vmatpush1.bf16.msra.mxu0 0
        %1103 = vmatprep.subr.bf16.mxu0 0
        %1104 = vmatpush1.bf16.msra.mxu0 0
        %1105 = vmatprep.subr.bf16.mxu0 0
        %1106 = vmatpush1.bf16.msra.mxu0 0
        %1107 = vmatprep.subr.bf16.mxu0 0
        %1108 = vmatpush1.bf16.msra.mxu0 0
        %1109 = vmatprep.subr.bf16.mxu0 0
        %1110 = vmatpush1.bf16.msra.mxu0 0
        %1111 = vmatprep.mubr.bf16.mxu0 0
        %1112 = vmatmul.mubr.bf16.gmra.mrb[0].mxu0 %v517
        %v1113 = vpop.f32.mrb[0].mxu0
        %v1114 = vadd.f32 %v408, %v1113
        %v1115 = vpop.f32.mrb[0].mxu0
        %v1116 = vadd.f32 %v408, %v1115
        %v1117 = vpop.f32.mrb[0].mxu0
        %v1118 = vadd.f32 %v413, %v1117
        %v1119 = vpop.f32.mrb[0].mxu0
        %v1120 = vadd.f32 %v413, %v1119
        %1121 = vmatprep.mubr.bf16.mxu0 0
        %1122 = vmatmul.mubr.bf16.gmra.mrb[0].mxu0 %v518
        %v1123 = vpop.f32.mrb[0].mxu0
        %v1124 = vadd.f32 %v418, %v1123
        %v1125 = vpop.f32.mrb[0].mxu0
        %v1126 = vadd.f32 %v418, %v1125
        %v1127 = vpop.f32.mrb[0].mxu0
        %v1128 = vadd.f32 %v423, %v1127
        %v1129 = vpop.f32.mrb[0].mxu0
        %v1130 = vadd.f32 %v423, %v1129
        %1131 = vmatprep.mubr.bf16.mxu0 0
        %1132 = vmatmul.mubr.bf16.gmra.mrb[0].mxu0 %v519
        %v1133 = vpop.f32.mrb[0].mxu0
        %v1134 = vadd.f32 %v428, %v1133
        %v1135 = vpop.f32.mrb[0].mxu0
        %v1136 = vadd.f32 %v428, %v1135
        %v1137 = vpop.f32.mrb[0].mxu0
        %v1138 = vadd.f32 %v433, %v1137
        %v1139 = vpop.f32.mrb[0].mxu0
        %v1140 = vadd.f32 %v433, %v1139
        %1141 = vmatprep.mubr.bf16.mxu0 0
        %1142 = vmatmul.mubr.bf16.gmra.mrb[0].mxu0 %v520
        %v1143 = vpop.f32.mrb[0].mxu0
        %v1144 = vadd.f32 %v438, %v1143
        %v1145 = vpop.f32.mrb[0].mxu0
        %v1146 = vadd.f32 %v438, %v1145
        %v1147 = vpop.f32.mrb[0].mxu0
        %v1148 = vadd.f32 %v443, %v1147
        %v1149 = vpop.f32.mrb[0].mxu0
        %v1150 = vadd.f32 %v443, %v1149
        %1151 = vmatprep.mubr.bf16.mxu0 0
        %1152 = vmatmul.mubr.bf16.gmra.mrb[0].mxu0 %v521
        %v1153 = vpop.f32.mrb[0].mxu0
        %v1154 = vadd.f32 %v448, %v1153
        %v1155 = vpop.f32.mrb[0].mxu0
        %v1156 = vadd.f32 %v448, %v1155
        %v1157 = vpop.f32.mrb[0].mxu0
        %v1158 = vadd.f32 %v453, %v1157
        %v1159 = vpop.f32.mrb[0].mxu0
        %v1160 = vadd.f32 %v453, %v1159
        %1161 = vmatprep.mubr.bf16.mxu0 0
        %1162 = vmatmul.mubr.bf16.gmra.mrb[0].mxu0 %v522
        %v1163 = vpop.f32.mrb[0].mxu0
        %v1164 = vadd.f32 %v458, %v1163
        %v1165 = vpop.f32.mrb[0].mxu0
        %v1166 = vadd.f32 %v458, %v1165
        %v1167 = vpop.f32.mrb[0].mxu0
        %v1168 = vadd.f32 %v463, %v1167
        %v1169 = vpop.f32.mrb[0].mxu0
        %v1170 = vadd.f32 %v463, %v1169
        %1171 = vmatprep.mubr.bf16.mxu0 0
        %1172 = vmatmul.mubr.bf16.gmra.mrb[0].mxu0 %v523
        %v1173 = vpop.f32.mrb[0].mxu0
        %v1174 = vadd.f32 %v468, %v1173
        %v1175 = vpop.f32.mrb[0].mxu0
        %v1176 = vadd.f32 %v468, %v1175
        %v1177 = vpop.f32.mrb[0].mxu0
        %v1178 = vadd.f32 %v473, %v1177
        %v1179 = vpop.f32.mrb[0].mxu0
        %v1180 = vadd.f32 %v473, %v1179
        %1181 = vmatprep.mubr.bf16.mxu0 0
        %1182 = vmatmul.mubr.bf16.gmra.mrb[0].mxu0 %v524
        %v1183 = vpop.f32.mrb[0].mxu0
        %v1184 = vadd.f32 %v478, %v1183
        %v1185 = vpop.f32.mrb[0].mxu0
        %v1186 = vadd.f32 %v478, %v1185
        %v1187 = vpop.f32.mrb[0].mxu0
        %v1188 = vadd.f32 %v483, %v1187
        %v1189 = vpop.f32.mrb[0].mxu0
        %v1190 = vadd.f32 %v483, %v1189
        %1191 = vdwg.mxu0
        %1192 = vmatprep.subr.bf16.mxu0 %v732
        %1193 = vmatpush1.bf16.msra.mxu0 %v731
        %1194 = vmatprep.subr.bf16.mxu0 %v740
        %1195 = vmatpush1.bf16.msra.mxu0 %v739
        %1196 = vmatprep.subr.bf16.mxu0 %v748
        %1197 = vmatpush1.bf16.msra.mxu0 %v747
        %1198 = vmatprep.subr.bf16.mxu0 %v756
        %1199 = vmatpush1.bf16.msra.mxu0 %v755
        %1200 = vmatprep.subr.bf16.mxu0 %v764
        %1201 = vmatpush1.bf16.msra.mxu0 %v763
        %1202 = vmatprep.subr.bf16.mxu0 %v772
        %1203 = vmatpush1.bf16.msra.mxu0 %v771
        %1204 = vmatprep.subr.bf16.mxu0 %v780
        %1205 = vmatpush1.bf16.msra.mxu0 %v779
        %1206 = vmatprep.subr.bf16.mxu0 %v788
        %1207 = vmatpush1.bf16.msra.mxu0 %v787
        %1208 = vmatprep.subr.bf16.mxu0 0
        %1209 = vmatpush1.bf16.msra.mxu0 0
        %1210 = vmatprep.subr.bf16.mxu0 0
        %1211 = vmatpush1.bf16.msra.mxu0 0
        %1212 = vmatprep.subr.bf16.mxu0 0
        %1213 = vmatpush1.bf16.msra.mxu0 0
        %1214 = vmatprep.subr.bf16.mxu0 0
        %1215 = vmatpush1.bf16.msra.mxu0 0
        %1216 = vmatprep.subr.bf16.mxu0 0
        %1217 = vmatpush1.bf16.msra.mxu0 0
        %1218 = vmatprep.subr.bf16.mxu0 0
        %1219 = vmatpush1.bf16.msra.mxu0 0
        %1220 = vmatprep.subr.bf16.mxu0 0
        %1221 = vmatpush1.bf16.msra.mxu0 0
        %1222 = vmatprep.subr.bf16.mxu0 0
        %1223 = vmatpush1.bf16.msra.mxu0 0
        %1224 = vmatprep.mubr.bf16.mxu0 0
        %1225 = vmatmul.mubr.bf16.gmra.mrb[0].mxu0 %v517
        %v1226 = vpop.f32.mrb[0].mxu0
        %v1227 = vadd.f32 %v408, %v1226
        %v1228 = vpop.f32.mrb[0].mxu0
        %v1229 = vadd.f32 %v408, %v1228
        %v1230 = vpop.f32.mrb[0].mxu0
        %v1231 = vadd.f32 %v413, %v1230
        %v1232 = vpop.f32.mrb[0].mxu0
        %v1233 = vadd.f32 %v413, %v1232
        %1234 = vmatprep.mubr.bf16.mxu0 0
        %1235 = vmatmul.mubr.bf16.gmra.mrb[0].mxu0 %v518
        %v1236 = vpop.f32.mrb[0].mxu0
        %v1237 = vadd.f32 %v418, %v1236
        %v1238 = vpop.f32.mrb[0].mxu0
        %v1239 = vadd.f32 %v418, %v1238
        %v1240 = vpop.f32.mrb[0].mxu0
        %v1241 = vadd.f32 %v423, %v1240
        %v1242 = vpop.f32.mrb[0].mxu0
        %v1243 = vadd.f32 %v423, %v1242
        %1244 = vmatprep.mubr.bf16.mxu0 0
        %1245 = vmatmul.mubr.bf16.gmra.mrb[0].mxu0 %v519
        %v1246 = vpop.f32.mrb[0].mxu0
        %v1247 = vadd.f32 %v428, %v1246
        %v1248 = vpop.f32.mrb[0].mxu0
        %v1249 = vadd.f32 %v428, %v1248
        %v1250 = vpop.f32.mrb[0].mxu0
        %v1251 = vadd.f32 %v433, %v1250
        %v1252 = vpop.f32.mrb[0].mxu0
        %v1253 = vadd.f32 %v433, %v1252
        %1254 = vmatprep.mubr.bf16.mxu0 0
        %1255 = vmatmul.mubr.bf16.gmra.mrb[0].mxu0 %v520
        %v1256 = vpop.f32.mrb[0].mxu0
        %v1257 = vadd.f32 %v438, %v1256
        %v1258 = vpop.f32.mrb[0].mxu0
        %v1259 = vadd.f32 %v438, %v1258
        %v1260 = vpop.f32.mrb[0].mxu0
        %v1261 = vadd.f32 %v443, %v1260
        %v1262 = vpop.f32.mrb[0].mxu0
        %v1263 = vadd.f32 %v443, %v1262
        %1264 = vmatprep.mubr.bf16.mxu0 0
        %1265 = vmatmul.mubr.bf16.gmra.mrb[0].mxu0 %v521
        %v1266 = vpop.f32.mrb[0].mxu0
        %v1267 = vadd.f32 %v448, %v1266
        %v1268 = vpop.f32.mrb[0].mxu0
        %v1269 = vadd.f32 %v448, %v1268
        %v1270 = vpop.f32.mrb[0].mxu0
        %v1271 = vadd.f32 %v453, %v1270
        %v1272 = vpop.f32.mrb[0].mxu0
        %v1273 = vadd.f32 %v453, %v1272
        %1274 = vmatprep.mubr.bf16.mxu0 0
        %1275 = vmatmul.mubr.bf16.gmra.mrb[0].mxu0 %v522
        %v1276 = vpop.f32.mrb[0].mxu0
        %v1277 = vadd.f32 %v458, %v1276
        %v1278 = vpop.f32.mrb[0].mxu0
        %v1279 = vadd.f32 %v458, %v1278
        %v1280 = vpop.f32.mrb[0].mxu0
        %v1281 = vadd.f32 %v463, %v1280
        %v1282 = vpop.f32.mrb[0].mxu0
        %v1283 = vadd.f32 %v463, %v1282
        %1284 = vmatprep.mubr.bf16.mxu0 0
        %1285 = vmatmul.mubr.bf16.gmra.mrb[0].mxu0 %v523
        %v1286 = vpop.f32.mrb[0].mxu0
        %v1287 = vadd.f32 %v468, %v1286
        %v1288 = vpop.f32.mrb[0].mxu0
        %v1289 = vadd.f32 %v468, %v1288
        %v1290 = vpop.f32.mrb[0].mxu0
        %v1291 = vadd.f32 %v473, %v1290
        %v1292 = vpop.f32.mrb[0].mxu0
        %v1293 = vadd.f32 %v473, %v1292
        %1294 = vmatprep.mubr.bf16.mxu0 0
        %1295 = vmatmul.mubr.bf16.gmra.mrb[0].mxu0 %v524
        %v1296 = vpop.f32.mrb[0].mxu0
        %v1297 = vadd.f32 %v478, %v1296
        %v1298 = vpop.f32.mrb[0].mxu0
        %v1299 = vadd.f32 %v478, %v1298
        %v1300 = vpop.f32.mrb[0].mxu0
        %v1301 = vadd.f32 %v483, %v1300
        %v1302 = vpop.f32.mrb[0].mxu0
        %v1303 = vadd.f32 %v483, %v1302
        %1304 = vdwg.mxu0
        %v1305 = vmax.f32 %v888, 0.0
        %v1306 = vmax.f32 %v890, 0.0
        %v1307 = vmax.f32 %v1001, 0.0
        %v1308 = vmax.f32 %v1003, 0.0
        %v1309 = vmax.f32 %v1114, 0.0
        %v1310 = vmax.f32 %v1116, 0.0
        %v1311 = vmax.f32 %v1227, 0.0
        %v1312 = vmax.f32 %v1229, 0.0
        %v1313 = vmax.f32 %v892, 0.0
        %v1314 = vmax.f32 %v894, 0.0
        %v1315 = vmax.f32 %v1005, 0.0
        %v1316 = vmax.f32 %v1007, 0.0
        %v1317 = vmax.f32 %v1118, 0.0
        %v1318 = vmax.f32 %v1120, 0.0
        %v1319 = vmax.f32 %v1231, 0.0
        %v1320 = vmax.f32 %v1233, 0.0
        %v1321 = vmax.f32 %v898, 0.0
        %v1322 = vmax.f32 %v900, 0.0
        %v1323 = vmax.f32 %v1011, 0.0
        %v1324 = vmax.f32 %v1013, 0.0
        %v1325 = vmax.f32 %v1124, 0.0
        %v1326 = vmax.f32 %v1126, 0.0
        %v1327 = vmax.f32 %v1237, 0.0
        %v1328 = vmax.f32 %v1239, 0.0
        %v1329 = vmax.f32 %v902, 0.0
        %v1330 = vmax.f32 %v904, 0.0
        %v1331 = vmax.f32 %v1015, 0.0
        %v1332 = vmax.f32 %v1017, 0.0
        %v1333 = vmax.f32 %v1128, 0.0
        %v1334 = vmax.f32 %v1130, 0.0
        %v1335 = vmax.f32 %v1241, 0.0
        %v1336 = vmax.f32 %v1243, 0.0
        %v1337 = vmax.f32 %v908, 0.0
        %v1338 = vmax.f32 %v910, 0.0
        %v1339 = vmax.f32 %v1021, 0.0
        %v1340 = vmax.f32 %v1023, 0.0
        %v1341 = vmax.f32 %v1134, 0.0
        %v1342 = vmax.f32 %v1136, 0.0
        %v1343 = vmax.f32 %v1247, 0.0
        %v1344 = vmax.f32 %v1249, 0.0
        %v1345 = vmax.f32 %v912, 0.0
        %v1346 = vmax.f32 %v914, 0.0
        %v1347 = vmax.f32 %v1025, 0.0
        %v1348 = vmax.f32 %v1027, 0.0
        %v1349 = vmax.f32 %v1138, 0.0
        %v1350 = vmax.f32 %v1140, 0.0
        %v1351 = vmax.f32 %v1251, 0.0
        %v1352 = vmax.f32 %v1253, 0.0
        %v1353 = vmax.f32 %v918, 0.0
        %v1354 = vmax.f32 %v920, 0.0
        %v1355 = vmax.f32 %v1031, 0.0
        %v1356 = vmax.f32 %v1033, 0.0
        %v1357 = vmax.f32 %v1144, 0.0
        %v1358 = vmax.f32 %v1146, 0.0
        %v1359 = vmax.f32 %v1257, 0.0
        %v1360 = vmax.f32 %v1259, 0.0
        %v1361 = vmax.f32 %v922, 0.0
        %v1362 = vmax.f32 %v924, 0.0
        %v1363 = vmax.f32 %v1035, 0.0
        %v1364 = vmax.f32 %v1037, 0.0
        %v1365 = vmax.f32 %v1148, 0.0
        %v1366 = vmax.f32 %v1150, 0.0
        %v1367 = vmax.f32 %v1261, 0.0
        %v1368 = vmax.f32 %v1263, 0.0
        %v1369 = vmax.f32 %v928, 0.0
        %v1370 = vmax.f32 %v930, 0.0
        %v1371 = vmax.f32 %v1041, 0.0
        %v1372 = vmax.f32 %v1043, 0.0
        %v1373 = vmax.f32 %v1154, 0.0
        %v1374 = vmax.f32 %v1156, 0.0
        %v1375 = vmax.f32 %v1267, 0.0
        %v1376 = vmax.f32 %v1269, 0.0
        %v1377 = vmax.f32 %v932, 0.0
        %v1378 = vmax.f32 %v934, 0.0
        %v1379 = vmax.f32 %v1045, 0.0
        %v1380 = vmax.f32 %v1047, 0.0
        %v1381 = vmax.f32 %v1158, 0.0
        %v1382 = vmax.f32 %v1160, 0.0
        %v1383 = vmax.f32 %v1271, 0.0
        %v1384 = vmax.f32 %v1273, 0.0
        %v1385 = vmax.f32 %v938, 0.0
        %v1386 = vmax.f32 %v940, 0.0
        %v1387 = vmax.f32 %v1051, 0.0
        %v1388 = vmax.f32 %v1053, 0.0
        %v1389 = vmax.f32 %v1164, 0.0
        %v1390 = vmax.f32 %v1166, 0.0
        %v1391 = vmax.f32 %v1277, 0.0
        %v1392 = vmax.f32 %v1279, 0.0
        %v1393 = vmax.f32 %v942, 0.0
        %v1394 = vmax.f32 %v944, 0.0
        %v1395 = vmax.f32 %v1055, 0.0
        %v1396 = vmax.f32 %v1057, 0.0
        %v1397 = vmax.f32 %v1168, 0.0
        %v1398 = vmax.f32 %v1170, 0.0
        %v1399 = vmax.f32 %v1281, 0.0
        %v1400 = vmax.f32 %v1283, 0.0
        %v1401 = vmax.f32 %v948, 0.0
        %v1402 = vmax.f32 %v950, 0.0
        %v1403 = vmax.f32 %v1061, 0.0
        %v1404 = vmax.f32 %v1063, 0.0
        %v1405 = vmax.f32 %v1174, 0.0
        %v1406 = vmax.f32 %v1176, 0.0
        %v1407 = vmax.f32 %v1287, 0.0
        %v1408 = vmax.f32 %v1289, 0.0
        %v1409 = vmax.f32 %v952, 0.0
        %v1410 = vmax.f32 %v954, 0.0
        %v1411 = vmax.f32 %v1065, 0.0
        %v1412 = vmax.f32 %v1067, 0.0
        %v1413 = vmax.f32 %v1178, 0.0
        %v1414 = vmax.f32 %v1180, 0.0
        %v1415 = vmax.f32 %v1291, 0.0
        %v1416 = vmax.f32 %v1293, 0.0
        %v1417 = vmax.f32 %v958, 0.0
        %v1418 = vmax.f32 %v960, 0.0
        %v1419 = vmax.f32 %v1071, 0.0
        %v1420 = vmax.f32 %v1073, 0.0
        %v1421 = vmax.f32 %v1184, 0.0
        %v1422 = vmax.f32 %v1186, 0.0
        %v1423 = vmax.f32 %v1297, 0.0
        %v1424 = vmax.f32 %v1299, 0.0
        %v1425 = vmax.f32 %v962, 0.0
        %v1426 = vmax.f32 %v964, 0.0
        %v1427 = vmax.f32 %v1075, 0.0
        %v1428 = vmax.f32 %v1077, 0.0
        %v1429 = vmax.f32 %v1188, 0.0
        %v1430 = vmax.f32 %v1190, 0.0
        %v1431 = vmax.f32 %v1301, 0.0
        %v1432 = vmax.f32 %v1303, 0.0
        %v1433 = vld [vmem:[%s3] sm:$0xf]
        %v1434 = vld [vmem:[%s3 + $0x4] sm:$0xf]
        %v1435 = vld [vmem:[%s3 + $0x8] sm:$0xf]
        %v1436 = vld [vmem:[%s3 + $0xc] sm:$0xf]
        %v1437 = vld [vmem:[%s3 + $0x10] sm:$0xf]
        %v1438 = vld [vmem:[%s3 + $0x14] sm:$0xf]
        %v1439 = vld [vmem:[%s3 + $0x18] sm:$0xf]
        %v1440 = vld [vmem:[%s3 + $0x1c] sm:$0xf]
        %v1441 = vld [vmem:[%s3 + $0x20] sm:$0xf]
        %v1442 = vld [vmem:[%s3 + $0x24] sm:$0xf]
        %v1443 = vld [vmem:[%s3 + $0x28] sm:$0xf]
        %v1444 = vld [vmem:[%s3 + $0x2c] sm:$0xf]
        %v1445 = vld [vmem:[%s3 + $0x30] sm:$0xf]
        %v1446 = vld [vmem:[%s3 + $0x34] sm:$0xf]
        %v1447 = vld [vmem:[%s3 + $0x38] sm:$0xf]
        %v1448 = vld [vmem:[%s3 + $0x3c] sm:$0xf]
        %v1449 = vpack.c.bf16 %v1313, %v1305
        %v1450 = vpack.c.bf16 %v1314, %v1306
        %v1451 = vpack.c.bf16 %v1315, %v1307
        %v1452 = vpack.c.bf16 %v1316, %v1308
        %v1453 = vpack.c.bf16 %v1317, %v1309
        %v1454 = vpack.c.bf16 %v1318, %v1310
        %v1455 = vpack.c.bf16 %v1319, %v1311
        %v1456 = vpack.c.bf16 %v1320, %v1312
        %v1457 = vpack.c.bf16 %v1329, %v1321
        %v1458 = vpack.c.bf16 %v1330, %v1322
        %v1459 = vpack.c.bf16 %v1331, %v1323
        %v1460 = vpack.c.bf16 %v1332, %v1324
        %v1461 = vpack.c.bf16 %v1333, %v1325
        %v1462 = vpack.c.bf16 %v1334, %v1326
        %v1463 = vpack.c.bf16 %v1335, %v1327
        %v1464 = vpack.c.bf16 %v1336, %v1328
        %v1465 = vpack.c.bf16 %v1345, %v1337
        %v1466 = vpack.c.bf16 %v1346, %v1338
        %v1467 = vpack.c.bf16 %v1347, %v1339
        %v1468 = vpack.c.bf16 %v1348, %v1340
        %v1469 = vpack.c.bf16 %v1349, %v1341
        %v1470 = vpack.c.bf16 %v1350, %v1342
        %v1471 = vpack.c.bf16 %v1351, %v1343
        %v1472 = vpack.c.bf16 %v1352, %v1344
        %v1473 = vpack.c.bf16 %v1361, %v1353
        %v1474 = vpack.c.bf16 %v1362, %v1354
        %v1475 = vpack.c.bf16 %v1363, %v1355
        %v1476 = vpack.c.bf16 %v1364, %v1356
        %v1477 = vpack.c.bf16 %v1365, %v1357
        %v1478 = vpack.c.bf16 %v1366, %v1358
        %v1479 = vpack.c.bf16 %v1367, %v1359
        %v1480 = vpack.c.bf16 %v1368, %v1360
        %v1481 = vpack.c.bf16 %v1377, %v1369
        %v1482 = vpack.c.bf16 %v1378, %v1370
        %v1483 = vpack.c.bf16 %v1379, %v1371
        %v1484 = vpack.c.bf16 %v1380, %v1372
        %v1485 = vpack.c.bf16 %v1381, %v1373
        %v1486 = vpack.c.bf16 %v1382, %v1374
        %v1487 = vpack.c.bf16 %v1383, %v1375
        %v1488 = vpack.c.bf16 %v1384, %v1376
        %v1489 = vpack.c.bf16 %v1393, %v1385
        %v1490 = vpack.c.bf16 %v1394, %v1386
        %v1491 = vpack.c.bf16 %v1395, %v1387
        %v1492 = vpack.c.bf16 %v1396, %v1388
        %v1493 = vpack.c.bf16 %v1397, %v1389
        %v1494 = vpack.c.bf16 %v1398, %v1390
        %v1495 = vpack.c.bf16 %v1399, %v1391
        %v1496 = vpack.c.bf16 %v1400, %v1392
        %v1497 = vpack.c.bf16 %v1409, %v1401
        %v1498 = vpack.c.bf16 %v1410, %v1402
        %v1499 = vpack.c.bf16 %v1411, %v1403
        %v1500 = vpack.c.bf16 %v1412, %v1404
        %v1501 = vpack.c.bf16 %v1413, %v1405
        %v1502 = vpack.c.bf16 %v1414, %v1406
        %v1503 = vpack.c.bf16 %v1415, %v1407
        %v1504 = vpack.c.bf16 %v1416, %v1408
        %v1505 = vpack.c.bf16 %v1425, %v1417
        %v1506 = vpack.c.bf16 %v1426, %v1418
        %v1507 = vpack.c.bf16 %v1427, %v1419
        %v1508 = vpack.c.bf16 %v1428, %v1420
        %v1509 = vpack.c.bf16 %v1429, %v1421
        %v1510 = vpack.c.bf16 %v1430, %v1422
        %v1511 = vpack.c.bf16 %v1431, %v1423
        %v1512 = vpack.c.bf16 %v1432, %v1424
        %v1513 = vld [vmem:[%s4] sm:$0xff]
        %v1514 = vld [vmem:[%s4 + $0x8] sm:$0xff]
        %v1515 = vld [vmem:[%s4 + $0x10] sm:$0xff]
        %v1516 = vld [vmem:[%s4 + $0x18] sm:$0xff]
        %v1517 = vld [vmem:[%s4 + $0x20] sm:$0xff]
        %v1518 = vld [vmem:[%s4 + $0x28] sm:$0xff]
        %v1519 = vld [vmem:[%s4 + $0x30] sm:$0xff]
        %v1520 = vld [vmem:[%s4 + $0x38] sm:$0xff]
        %v1521 = vld [vmem:[%s4 + $0x40] sm:$0xff]
        %v1522 = vld [vmem:[%s4 + $0x48] sm:$0xff]
        %v1523 = vld [vmem:[%s4 + $0x50] sm:$0xff]
        %v1524 = vld [vmem:[%s4 + $0x58] sm:$0xff]
        %v1525 = vld [vmem:[%s4 + $0x60] sm:$0xff]
        %v1526 = vld [vmem:[%s4 + $0x68] sm:$0xff]
        %v1527 = vld [vmem:[%s4 + $0x70] sm:$0xff]
        %v1528 = vld [vmem:[%s4 + $0x78] sm:$0xff]
        %1530 = vset.pattern.permute.xlu0 0
        %1531 = vperm.xlu0 %1530, %v1513
        %v1532 = vpop.permute.xlu0 %1531
        %1535 = vset.pattern.permute.xlu0 0
        %1536 = vperm.xlu0 %1535, %v1514
        %v1537 = vpop.permute.xlu0 %1536
        %1540 = vset.pattern.permute.xlu0 0
        %1541 = vperm.xlu0 %1540, %v1515
        %v1542 = vpop.permute.xlu0 %1541
        %1545 = vset.pattern.permute.xlu0 0
        %1546 = vperm.xlu0 %1545, %v1516
        %v1547 = vpop.permute.xlu0 %1546
        %1550 = vset.pattern.permute.xlu0 0
        %1551 = vperm.xlu0 %1550, %v1517
        %v1552 = vpop.permute.xlu0 %1551
        %1555 = vset.pattern.permute.xlu0 0
        %1556 = vperm.xlu0 %1555, %v1518
        %v1557 = vpop.permute.xlu0 %1556
        %1560 = vset.pattern.permute.xlu0 0
        %1561 = vperm.xlu0 %1560, %v1519
        %v1562 = vpop.permute.xlu0 %1561
        %1565 = vset.pattern.permute.xlu0 0
        %1566 = vperm.xlu0 %1565, %v1520
        %v1567 = vpop.permute.xlu0 %1566
        %1570 = vset.pattern.permute.xlu0 0
        %1571 = vperm.xlu0 %1570, %v1521
        %v1572 = vpop.permute.xlu0 %1571
        %1575 = vset.pattern.permute.xlu0 0
        %1576 = vperm.xlu0 %1575, %v1522
        %v1577 = vpop.permute.xlu0 %1576
        %1580 = vset.pattern.permute.xlu0 0
        %1581 = vperm.xlu0 %1580, %v1523
        %v1582 = vpop.permute.xlu0 %1581
        %1585 = vset.pattern.permute.xlu0 0
        %1586 = vperm.xlu0 %1585, %v1524
        %v1587 = vpop.permute.xlu0 %1586
        %1590 = vset.pattern.permute.xlu0 0
        %1591 = vperm.xlu0 %1590, %v1525
        %v1592 = vpop.permute.xlu0 %1591
        %1595 = vset.pattern.permute.xlu0 0
        %1596 = vperm.xlu0 %1595, %v1526
        %v1597 = vpop.permute.xlu0 %1596
        %1600 = vset.pattern.permute.xlu0 0
        %1601 = vperm.xlu0 %1600, %v1527
        %v1602 = vpop.permute.xlu0 %1601
        %1605 = vset.pattern.permute.xlu0 0
        %1606 = vperm.xlu0 %1605, %v1528
        %v1607 = vpop.permute.xlu0 %1606
        %v1625 = vunpack.c.l.b16 %v1433
        %v1626 = vunpack.c.l.b16 %v1434
        %v1627 = vunpack.c.l.b16 %v1435
        %v1628 = vunpack.c.l.b16 %v1436
        %v1629 = vunpack.c.l.b16 %v1437
        %v1630 = vunpack.c.l.b16 %v1438
        %v1631 = vunpack.c.l.b16 %v1439
        %v1632 = vunpack.c.l.b16 %v1440
        %v1633 = vunpack.c.l.b16 %v1441
        %v1634 = vunpack.c.l.b16 %v1442
        %v1635 = vunpack.c.l.b16 %v1443
        %v1636 = vunpack.c.l.b16 %v1444
        %v1637 = vunpack.c.l.b16 %v1445
        %v1638 = vunpack.c.l.b16 %v1446
        %v1639 = vunpack.c.l.b16 %v1447
        %v1640 = vunpack.c.l.b16 %v1448
        %v1641 = vpack.c.b16 %v1626, %v1625
        %v1642 = vpack.c.b16 %v1628, %v1627
        %v1643 = vpack.c.b16 %v1630, %v1629
        %v1644 = vpack.c.b16 %v1632, %v1631
        %v1645 = vpack.c.b16 %v1634, %v1633
        %v1646 = vpack.c.b16 %v1636, %v1635
        %v1647 = vpack.c.b16 %v1638, %v1637
        %v1648 = vpack.c.b16 %v1640, %v1639
        %1657 = vmatprep.subr.bf16.mxu0 %v1450
        %1658 = vmatpush1.bf16.msra.mxu0 %v1449
        %1659 = vmatprep.subr.bf16.mxu0 %v1458
        %1660 = vmatpush1.bf16.msra.mxu0 %v1457
        %1661 = vmatprep.subr.bf16.mxu0 %v1466
        %1662 = vmatpush1.bf16.msra.mxu0 %v1465
        %1663 = vmatprep.subr.bf16.mxu0 %v1474
        %1664 = vmatpush1.bf16.msra.mxu0 %v1473
        %1665 = vmatprep.subr.bf16.mxu0 %v1482
        %1666 = vmatpush1.bf16.msra.mxu0 %v1481
        %1667 = vmatprep.subr.bf16.mxu0 %v1490
        %1668 = vmatpush1.bf16.msra.mxu0 %v1489
        %1669 = vmatprep.subr.bf16.mxu0 %v1498
        %1670 = vmatpush1.bf16.msra.mxu0 %v1497
        %1671 = vmatprep.subr.bf16.mxu0 %v1506
        %1672 = vmatpush1.bf16.msra.mxu0 %v1505
        %1673 = vmatprep.subr.bf16.mxu0 0
        %1674 = vmatpush1.bf16.msra.mxu0 0
        %1675 = vmatprep.subr.bf16.mxu0 0
        %1676 = vmatpush1.bf16.msra.mxu0 0
        %1677 = vmatprep.subr.bf16.mxu0 0
        %1678 = vmatpush1.bf16.msra.mxu0 0
        %1679 = vmatprep.subr.bf16.mxu0 0
        %1680 = vmatpush1.bf16.msra.mxu0 0
        %1681 = vmatprep.subr.bf16.mxu0 0
        %1682 = vmatpush1.bf16.msra.mxu0 0
        %1683 = vmatprep.subr.bf16.mxu0 0
        %1684 = vmatpush1.bf16.msra.mxu0 0
        %1685 = vmatprep.subr.bf16.mxu0 0
        %1686 = vmatpush1.bf16.msra.mxu0 0
        %1687 = vmatprep.subr.bf16.mxu0 0
        %1688 = vmatpush1.bf16.msra.mxu0 0
        %1689 = vmatprep.mubr.bf16.mxu0 0
        %1690 = vmatmul.mubr.bf16.gmra.mrb[0].mxu0 %v1641
        %v1691 = vpop.f32.mrb[0].mxu0
        %v1692 = vadd.f32 %v1532, %v1691
        %v1693 = vpop.f32.mrb[0].mxu0
        %v1694 = vadd.f32 %v1532, %v1693
        %v1695 = vpop.f32.mrb[0].mxu0
        %v1696 = vadd.f32 %v1537, %v1695
        %v1697 = vpop.f32.mrb[0].mxu0
        %v1698 = vadd.f32 %v1537, %v1697
        %1699 = vmatprep.mubr.bf16.mxu0 0
        %1700 = vmatmul.mubr.bf16.gmra.mrb[0].mxu0 %v1642
        %v1701 = vpop.f32.mrb[0].mxu0
        %v1702 = vadd.f32 %v1542, %v1701
        %v1703 = vpop.f32.mrb[0].mxu0
        %v1704 = vadd.f32 %v1542, %v1703
        %v1705 = vpop.f32.mrb[0].mxu0
        %v1706 = vadd.f32 %v1547, %v1705
        %v1707 = vpop.f32.mrb[0].mxu0
        %v1708 = vadd.f32 %v1547, %v1707
        %1709 = vmatprep.mubr.bf16.mxu0 0
        %1710 = vmatmul.mubr.bf16.gmra.mrb[0].mxu0 %v1643
        %v1711 = vpop.f32.mrb[0].mxu0
        %v1712 = vadd.f32 %v1552, %v1711
        %v1713 = vpop.f32.mrb[0].mxu0
        %v1714 = vadd.f32 %v1552, %v1713
        %v1715 = vpop.f32.mrb[0].mxu0
        %v1716 = vadd.f32 %v1557, %v1715
        %v1717 = vpop.f32.mrb[0].mxu0
        %v1718 = vadd.f32 %v1557, %v1717
        %1719 = vmatprep.mubr.bf16.mxu0 0
        %1720 = vmatmul.mubr.bf16.gmra.mrb[0].mxu0 %v1644
        %v1721 = vpop.f32.mrb[0].mxu0
        %v1722 = vadd.f32 %v1562, %v1721
        %v1723 = vpop.f32.mrb[0].mxu0
        %v1724 = vadd.f32 %v1562, %v1723
        %v1725 = vpop.f32.mrb[0].mxu0
        %v1726 = vadd.f32 %v1567, %v1725
        %v1727 = vpop.f32.mrb[0].mxu0
        %v1728 = vadd.f32 %v1567, %v1727
        %1729 = vmatprep.mubr.bf16.mxu0 0
        %1730 = vmatmul.mubr.bf16.gmra.mrb[0].mxu0 %v1645
        %v1731 = vpop.f32.mrb[0].mxu0
        %v1732 = vadd.f32 %v1572, %v1731
        %v1733 = vpop.f32.mrb[0].mxu0
        %v1734 = vadd.f32 %v1572, %v1733
        %v1735 = vpop.f32.mrb[0].mxu0
        %v1736 = vadd.f32 %v1577, %v1735
        %v1737 = vpop.f32.mrb[0].mxu0
        %v1738 = vadd.f32 %v1577, %v1737
        %1739 = vmatprep.mubr.bf16.mxu0 0
        %1740 = vmatmul.mubr.bf16.gmra.mrb[0].mxu0 %v1646
        %v1741 = vpop.f32.mrb[0].mxu0
        %v1742 = vadd.f32 %v1582, %v1741
        %v1743 = vpop.f32.mrb[0].mxu0
        %v1744 = vadd.f32 %v1582, %v1743
        %v1745 = vpop.f32.mrb[0].mxu0
        %v1746 = vadd.f32 %v1587, %v1745
        %v1747 = vpop.f32.mrb[0].mxu0
        %v1748 = vadd.f32 %v1587, %v1747
        %1749 = vmatprep.mubr.bf16.mxu0 0
        %1750 = vmatmul.mubr.bf16.gmra.mrb[0].mxu0 %v1647
        %v1751 = vpop.f32.mrb[0].mxu0
        %v1752 = vadd.f32 %v1592, %v1751
        %v1753 = vpop.f32.mrb[0].mxu0
        %v1754 = vadd.f32 %v1592, %v1753
        %v1755 = vpop.f32.mrb[0].mxu0
        %v1756 = vadd.f32 %v1597, %v1755
        %v1757 = vpop.f32.mrb[0].mxu0
        %v1758 = vadd.f32 %v1597, %v1757
        %1759 = vmatprep.mubr.bf16.mxu0 0
        %1760 = vmatmul.mubr.bf16.gmra.mrb[0].mxu0 %v1648
        %v1761 = vpop.f32.mrb[0].mxu0
        %v1762 = vadd.f32 %v1602, %v1761
        %v1763 = vpop.f32.mrb[0].mxu0
        %v1764 = vadd.f32 %v1602, %v1763
        %v1765 = vpop.f32.mrb[0].mxu0
        %v1766 = vadd.f32 %v1607, %v1765
        %v1767 = vpop.f32.mrb[0].mxu0
        %v1768 = vadd.f32 %v1607, %v1767
        %1769 = vdwg.mxu0
        %1770 = vmatprep.subr.bf16.mxu0 %v1452
        %1771 = vmatpush1.bf16.msra.mxu0 %v1451
        %1772 = vmatprep.subr.bf16.mxu0 %v1460
        %1773 = vmatpush1.bf16.msra.mxu0 %v1459
        %1774 = vmatprep.subr.bf16.mxu0 %v1468
        %1775 = vmatpush1.bf16.msra.mxu0 %v1467
        %1776 = vmatprep.subr.bf16.mxu0 %v1476
        %1777 = vmatpush1.bf16.msra.mxu0 %v1475
        %1778 = vmatprep.subr.bf16.mxu0 %v1484
        %1779 = vmatpush1.bf16.msra.mxu0 %v1483
        %1780 = vmatprep.subr.bf16.mxu0 %v1492
        %1781 = vmatpush1.bf16.msra.mxu0 %v1491
        %1782 = vmatprep.subr.bf16.mxu0 %v1500
        %1783 = vmatpush1.bf16.msra.mxu0 %v1499
        %1784 = vmatprep.subr.bf16.mxu0 %v1508
        %1785 = vmatpush1.bf16.msra.mxu0 %v1507
        %1786 = vmatprep.subr.bf16.mxu0 0
        %1787 = vmatpush1.bf16.msra.mxu0 0
        %1788 = vmatprep.subr.bf16.mxu0 0
        %1789 = vmatpush1.bf16.msra.mxu0 0
        %1790 = vmatprep.subr.bf16.mxu0 0
        %1791 = vmatpush1.bf16.msra.mxu0 0
        %1792 = vmatprep.subr.bf16.mxu0 0
        %1793 = vmatpush1.bf16.msra.mxu0 0
        %1794 = vmatprep.subr.bf16.mxu0 0
        %1795 = vmatpush1.bf16.msra.mxu0 0
        %1796 = vmatprep.subr.bf16.mxu0 0
        %1797 = vmatpush1.bf16.msra.mxu0 0
        %1798 = vmatprep.subr.bf16.mxu0 0
        %1799 = vmatpush1.bf16.msra.mxu0 0
        %1800 = vmatprep.subr.bf16.mxu0 0
        %1801 = vmatpush1.bf16.msra.mxu0 0
        %1802 = vmatprep.mubr.bf16.mxu0 0
        %1803 = vmatmul.mubr.bf16.gmra.mrb[0].mxu0 %v1641
        %v1804 = vpop.f32.mrb[0].mxu0
        %v1805 = vadd.f32 %v1532, %v1804
        %v1806 = vpop.f32.mrb[0].mxu0
        %v1807 = vadd.f32 %v1532, %v1806
        %v1808 = vpop.f32.mrb[0].mxu0
        %v1809 = vadd.f32 %v1537, %v1808
        %v1810 = vpop.f32.mrb[0].mxu0
        %v1811 = vadd.f32 %v1537, %v1810
        %1812 = vmatprep.mubr.bf16.mxu0 0
        %1813 = vmatmul.mubr.bf16.gmra.mrb[0].mxu0 %v1642
        %v1814 = vpop.f32.mrb[0].mxu0
        %v1815 = vadd.f32 %v1542, %v1814
        %v1816 = vpop.f32.mrb[0].mxu0
        %v1817 = vadd.f32 %v1542, %v1816
        %v1818 = vpop.f32.mrb[0].mxu0
        %v1819 = vadd.f32 %v1547, %v1818
        %v1820 = vpop.f32.mrb[0].mxu0
        %v1821 = vadd.f32 %v1547, %v1820
        %1822 = vmatprep.mubr.bf16.mxu0 0
        %1823 = vmatmul.mubr.bf16.gmra.mrb[0].mxu0 %v1643
        %v1824 = vpop.f32.mrb[0].mxu0
        %v1825 = vadd.f32 %v1552, %v1824
        %v1826 = vpop.f32.mrb[0].mxu0
        %v1827 = vadd.f32 %v1552, %v1826
        %v1828 = vpop.f32.mrb[0].mxu0
        %v1829 = vadd.f32 %v1557, %v1828
        %v1830 = vpop.f32.mrb[0].mxu0
        %v1831 = vadd.f32 %v1557, %v1830
        %1832 = vmatprep.mubr.bf16.mxu0 0
        %1833 = vmatmul.mubr.bf16.gmra.mrb[0].mxu0 %v1644
        %v1834 = vpop.f32.mrb[0].mxu0
        %v1835 = vadd.f32 %v1562, %v1834
        %v1836 = vpop.f32.mrb[0].mxu0
        %v1837 = vadd.f32 %v1562, %v1836
        %v1838 = vpop.f32.mrb[0].mxu0
        %v1839 = vadd.f32 %v1567, %v1838
        %v1840 = vpop.f32.mrb[0].mxu0
        %v1841 = vadd.f32 %v1567, %v1840
        %1842 = vmatprep.mubr.bf16.mxu0 0
        %1843 = vmatmul.mubr.bf16.gmra.mrb[0].mxu0 %v1645
        %v1844 = vpop.f32.mrb[0].mxu0
        %v1845 = vadd.f32 %v1572, %v1844
        %v1846 = vpop.f32.mrb[0].mxu0
        %v1847 = vadd.f32 %v1572, %v1846
        %v1848 = vpop.f32.mrb[0].mxu0
        %v1849 = vadd.f32 %v1577, %v1848
        %v1850 = vpop.f32.mrb[0].mxu0
        %v1851 = vadd.f32 %v1577, %v1850
        %1852 = vmatprep.mubr.bf16.mxu0 0
        %1853 = vmatmul.mubr.bf16.gmra.mrb[0].mxu0 %v1646
        %v1854 = vpop.f32.mrb[0].mxu0
        %v1855 = vadd.f32 %v1582, %v1854
        %v1856 = vpop.f32.mrb[0].mxu0
        %v1857 = vadd.f32 %v1582, %v1856
        %v1858 = vpop.f32.mrb[0].mxu0
        %v1859 = vadd.f32 %v1587, %v1858
        %v1860 = vpop.f32.mrb[0].mxu0
        %v1861 = vadd.f32 %v1587, %v1860
        %1862 = vmatprep.mubr.bf16.mxu0 0
        %1863 = vmatmul.mubr.bf16.gmra.mrb[0].mxu0 %v1647
        %v1864 = vpop.f32.mrb[0].mxu0
        %v1865 = vadd.f32 %v1592, %v1864
        %v1866 = vpop.f32.mrb[0].mxu0
        %v1867 = vadd.f32 %v1592, %v1866
        %v1868 = vpop.f32.mrb[0].mxu0
        %v1869 = vadd.f32 %v1597, %v1868
        %v1870 = vpop.f32.mrb[0].mxu0
        %v1871 = vadd.f32 %v1597, %v1870
        %1872 = vmatprep.mubr.bf16.mxu0 0
        %1873 = vmatmul.mubr.bf16.gmra.mrb[0].mxu0 %v1648
        %v1874 = vpop.f32.mrb[0].mxu0
        %v1875 = vadd.f32 %v1602, %v1874
        %v1876 = vpop.f32.mrb[0].mxu0
        %v1877 = vadd.f32 %v1602, %v1876
        %v1878 = vpop.f32.mrb[0].mxu0
        %v1879 = vadd.f32 %v1607, %v1878
        %v1880 = vpop.f32.mrb[0].mxu0
        %v1881 = vadd.f32 %v1607, %v1880
        %1882 = vdwg.mxu0
        %1883 = vmatprep.subr.bf16.mxu0 %v1454
        %1884 = vmatpush1.bf16.msra.mxu0 %v1453
        %1885 = vmatprep.subr.bf16.mxu0 %v1462
        %1886 = vmatpush1.bf16.msra.mxu0 %v1461
        %1887 = vmatprep.subr.bf16.mxu0 %v1470
        %1888 = vmatpush1.bf16.msra.mxu0 %v1469
        %1889 = vmatprep.subr.bf16.mxu0 %v1478
        %1890 = vmatpush1.bf16.msra.mxu0 %v1477
        %1891 = vmatprep.subr.bf16.mxu0 %v1486
        %1892 = vmatpush1.bf16.msra.mxu0 %v1485
        %1893 = vmatprep.subr.bf16.mxu0 %v1494
        %1894 = vmatpush1.bf16.msra.mxu0 %v1493
        %1895 = vmatprep.subr.bf16.mxu0 %v1502
        %1896 = vmatpush1.bf16.msra.mxu0 %v1501
        %1897 = vmatprep.subr.bf16.mxu0 %v1510
        %1898 = vmatpush1.bf16.msra.mxu0 %v1509
        %1899 = vmatprep.subr.bf16.mxu0 0
        %1900 = vmatpush1.bf16.msra.mxu0 0
        %1901 = vmatprep.subr.bf16.mxu0 0
        %1902 = vmatpush1.bf16.msra.mxu0 0
        %1903 = vmatprep.subr.bf16.mxu0 0
        %1904 = vmatpush1.bf16.msra.mxu0 0
        %1905 = vmatprep.subr.bf16.mxu0 0
        %1906 = vmatpush1.bf16.msra.mxu0 0
        %1907 = vmatprep.subr.bf16.mxu0 0
        %1908 = vmatpush1.bf16.msra.mxu0 0
        %1909 = vmatprep.subr.bf16.mxu0 0
        %1910 = vmatpush1.bf16.msra.mxu0 0
        %1911 = vmatprep.subr.bf16.mxu0 0
        %1912 = vmatpush1.bf16.msra.mxu0 0
        %1913 = vmatprep.subr.bf16.mxu0 0
        %1914 = vmatpush1.bf16.msra.mxu0 0
        %1915 = vmatprep.mubr.bf16.mxu0 0
        %1916 = vmatmul.mubr.bf16.gmra.mrb[0].mxu0 %v1641
        %v1917 = vpop.f32.mrb[0].mxu0
        %v1918 = vadd.f32 %v1532, %v1917
        %v1919 = vpop.f32.mrb[0].mxu0
        %v1920 = vadd.f32 %v1532, %v1919
        %v1921 = vpop.f32.mrb[0].mxu0
        %v1922 = vadd.f32 %v1537, %v1921
        %v1923 = vpop.f32.mrb[0].mxu0
        %v1924 = vadd.f32 %v1537, %v1923
        %1925 = vmatprep.mubr.bf16.mxu0 0
        %1926 = vmatmul.mubr.bf16.gmra.mrb[0].mxu0 %v1642
        %v1927 = vpop.f32.mrb[0].mxu0
        %v1928 = vadd.f32 %v1542, %v1927
        %v1929 = vpop.f32.mrb[0].mxu0
        %v1930 = vadd.f32 %v1542, %v1929
        %v1931 = vpop.f32.mrb[0].mxu0
        %v1932 = vadd.f32 %v1547, %v1931
        %v1933 = vpop.f32.mrb[0].mxu0
        %v1934 = vadd.f32 %v1547, %v1933
        %1935 = vmatprep.mubr.bf16.mxu0 0
        %1936 = vmatmul.mubr.bf16.gmra.mrb[0].mxu0 %v1643
        %v1937 = vpop.f32.mrb[0].mxu0
        %v1938 = vadd.f32 %v1552, %v1937
        %v1939 = vpop.f32.mrb[0].mxu0
        %v1940 = vadd.f32 %v1552, %v1939
        %v1941 = vpop.f32.mrb[0].mxu0
        %v1942 = vadd.f32 %v1557, %v1941
        %v1943 = vpop.f32.mrb[0].mxu0
        %v1944 = vadd.f32 %v1557, %v1943
        %1945 = vmatprep.mubr.bf16.mxu0 0
        %1946 = vmatmul.mubr.bf16.gmra.mrb[0].mxu0 %v1644
        %v1947 = vpop.f32.mrb[0].mxu0
        %v1948 = vadd.f32 %v1562, %v1947
        %v1949 = vpop.f32.mrb[0].mxu0
        %v1950 = vadd.f32 %v1562, %v1949
        %v1951 = vpop.f32.mrb[0].mxu0
        %v1952 = vadd.f32 %v1567, %v1951
        %v1953 = vpop.f32.mrb[0].mxu0
        %v1954 = vadd.f32 %v1567, %v1953
        %1955 = vmatprep.mubr.bf16.mxu0 0
        %1956 = vmatmul.mubr.bf16.gmra.mrb[0].mxu0 %v1645
        %v1957 = vpop.f32.mrb[0].mxu0
        %v1958 = vadd.f32 %v1572, %v1957
        %v1959 = vpop.f32.mrb[0].mxu0
        %v1960 = vadd.f32 %v1572, %v1959
        %v1961 = vpop.f32.mrb[0].mxu0
        %v1962 = vadd.f32 %v1577, %v1961
        %v1963 = vpop.f32.mrb[0].mxu0
        %v1964 = vadd.f32 %v1577, %v1963
        %1965 = vmatprep.mubr.bf16.mxu0 0
        %1966 = vmatmul.mubr.bf16.gmra.mrb[0].mxu0 %v1646
        %v1967 = vpop.f32.mrb[0].mxu0
        %v1968 = vadd.f32 %v1582, %v1967
        %v1969 = vpop.f32.mrb[0].mxu0
        %v1970 = vadd.f32 %v1582, %v1969
        %v1971 = vpop.f32.mrb[0].mxu0
        %v1972 = vadd.f32 %v1587, %v1971
        %v1973 = vpop.f32.mrb[0].mxu0
        %v1974 = vadd.f32 %v1587, %v1973
        %1975 = vmatprep.mubr.bf16.mxu0 0
        %1976 = vmatmul.mubr.bf16.gmra.mrb[0].mxu0 %v1647
        %v1977 = vpop.f32.mrb[0].mxu0
        %v1978 = vadd.f32 %v1592, %v1977
        %v1979 = vpop.f32.mrb[0].mxu0
        %v1980 = vadd.f32 %v1592, %v1979
        %v1981 = vpop.f32.mrb[0].mxu0
        %v1982 = vadd.f32 %v1597, %v1981
        %v1983 = vpop.f32.mrb[0].mxu0
        %v1984 = vadd.f32 %v1597, %v1983
        %1985 = vmatprep.mubr.bf16.mxu0 0
        %1986 = vmatmul.mubr.bf16.gmra.mrb[0].mxu0 %v1648
        %v1987 = vpop.f32.mrb[0].mxu0
        %v1988 = vadd.f32 %v1602, %v1987
        %v1989 = vpop.f32.mrb[0].mxu0
        %v1990 = vadd.f32 %v1602, %v1989
        %v1991 = vpop.f32.mrb[0].mxu0
        %v1992 = vadd.f32 %v1607, %v1991
        %v1993 = vpop.f32.mrb[0].mxu0
        %v1994 = vadd.f32 %v1607, %v1993
        %1995 = vdwg.mxu0
        %1996 = vmatprep.subr.bf16.mxu0 %v1456
        %1997 = vmatpush1.bf16.msra.mxu0 %v1455
        %1998 = vmatprep.subr.bf16.mxu0 %v1464
        %1999 = vmatpush1.bf16.msra.mxu0 %v1463
        %2000 = vmatprep.subr.bf16.mxu0 %v1472
        %2001 = vmatpush1.bf16.msra.mxu0 %v1471
        %2002 = vmatprep.subr.bf16.mxu0 %v1480
        %2003 = vmatpush1.bf16.msra.mxu0 %v1479
        %2004 = vmatprep.subr.bf16.mxu0 %v1488
        %2005 = vmatpush1.bf16.msra.mxu0 %v1487
        %2006 = vmatprep.subr.bf16.mxu0 %v1496
        %2007 = vmatpush1.bf16.msra.mxu0 %v1495
        %2008 = vmatprep.subr.bf16.mxu0 %v1504
        %2009 = vmatpush1.bf16.msra.mxu0 %v1503
        %2010 = vmatprep.subr.bf16.mxu0 %v1512
        %2011 = vmatpush1.bf16.msra.mxu0 %v1511
        %2012 = vmatprep.subr.bf16.mxu0 0
        %2013 = vmatpush1.bf16.msra.mxu0 0
        %2014 = vmatprep.subr.bf16.mxu0 0
        %2015 = vmatpush1.bf16.msra.mxu0 0
        %2016 = vmatprep.subr.bf16.mxu0 0
        %2017 = vmatpush1.bf16.msra.mxu0 0
        %2018 = vmatprep.subr.bf16.mxu0 0
        %2019 = vmatpush1.bf16.msra.mxu0 0
        %2020 = vmatprep.subr.bf16.mxu0 0
        %2021 = vmatpush1.bf16.msra.mxu0 0
        %2022 = vmatprep.subr.bf16.mxu0 0
        %2023 = vmatpush1.bf16.msra.mxu0 0
        %2024 = vmatprep.subr.bf16.mxu0 0
        %2025 = vmatpush1.bf16.msra.mxu0 0
        %2026 = vmatprep.subr.bf16.mxu0 0
        %2027 = vmatpush1.bf16.msra.mxu0 0
        %2028 = vmatprep.mubr.bf16.mxu0 0
        %2029 = vmatmul.mubr.bf16.gmra.mrb[0].mxu0 %v1641
        %v2030 = vpop.f32.mrb[0].mxu0
        %v2031 = vadd.f32 %v1532, %v2030
        %v2032 = vpop.f32.mrb[0].mxu0
        %v2033 = vadd.f32 %v1532, %v2032
        %v2034 = vpop.f32.mrb[0].mxu0
        %v2035 = vadd.f32 %v1537, %v2034
        %v2036 = vpop.f32.mrb[0].mxu0
        %v2037 = vadd.f32 %v1537, %v2036
        %2038 = vmatprep.mubr.bf16.mxu0 0
        %2039 = vmatmul.mubr.bf16.gmra.mrb[0].mxu0 %v1642
        %v2040 = vpop.f32.mrb[0].mxu0
        %v2041 = vadd.f32 %v1542, %v2040
        %v2042 = vpop.f32.mrb[0].mxu0
        %v2043 = vadd.f32 %v1542, %v2042
        %v2044 = vpop.f32.mrb[0].mxu0
        %v2045 = vadd.f32 %v1547, %v2044
        %v2046 = vpop.f32.mrb[0].mxu0
        %v2047 = vadd.f32 %v1547, %v2046
        %2048 = vmatprep.mubr.bf16.mxu0 0
        %2049 = vmatmul.mubr.bf16.gmra.mrb[0].mxu0 %v1643
        %v2050 = vpop.f32.mrb[0].mxu0
        %v2051 = vadd.f32 %v1552, %v2050
        %v2052 = vpop.f32.mrb[0].mxu0
        %v2053 = vadd.f32 %v1552, %v2052
        %v2054 = vpop.f32.mrb[0].mxu0
        %v2055 = vadd.f32 %v1557, %v2054
        %v2056 = vpop.f32.mrb[0].mxu0
        %v2057 = vadd.f32 %v1557, %v2056
        %2058 = vmatprep.mubr.bf16.mxu0 0
        %2059 = vmatmul.mubr.bf16.gmra.mrb[0].mxu0 %v1644
        %v2060 = vpop.f32.mrb[0].mxu0
        %v2061 = vadd.f32 %v1562, %v2060
        %v2062 = vpop.f32.mrb[0].mxu0
        %v2063 = vadd.f32 %v1562, %v2062
        %v2064 = vpop.f32.mrb[0].mxu0
        %v2065 = vadd.f32 %v1567, %v2064
        %v2066 = vpop.f32.mrb[0].mxu0
        %v2067 = vadd.f32 %v1567, %v2066
        %2068 = vmatprep.mubr.bf16.mxu0 0
        %2069 = vmatmul.mubr.bf16.gmra.mrb[0].mxu0 %v1645
        %v2070 = vpop.f32.mrb[0].mxu0
        %v2071 = vadd.f32 %v1572, %v2070
        %v2072 = vpop.f32.mrb[0].mxu0
        %v2073 = vadd.f32 %v1572, %v2072
        %v2074 = vpop.f32.mrb[0].mxu0
        %v2075 = vadd.f32 %v1577, %v2074
        %v2076 = vpop.f32.mrb[0].mxu0
        %v2077 = vadd.f32 %v1577, %v2076
        %2078 = vmatprep.mubr.bf16.mxu0 0
        %2079 = vmatmul.mubr.bf16.gmra.mrb[0].mxu0 %v1646
        %v2080 = vpop.f32.mrb[0].mxu0
        %v2081 = vadd.f32 %v1582, %v2080
        %v2082 = vpop.f32.mrb[0].mxu0
        %v2083 = vadd.f32 %v1582, %v2082
        %v2084 = vpop.f32.mrb[0].mxu0
        %v2085 = vadd.f32 %v1587, %v2084
        %v2086 = vpop.f32.mrb[0].mxu0
        %v2087 = vadd.f32 %v1587, %v2086
        %2088 = vmatprep.mubr.bf16.mxu0 0
        %2089 = vmatmul.mubr.bf16.gmra.mrb[0].mxu0 %v1647
        %v2090 = vpop.f32.mrb[0].mxu0
        %v2091 = vadd.f32 %v1592, %v2090
        %v2092 = vpop.f32.mrb[0].mxu0
        %v2093 = vadd.f32 %v1592, %v2092
        %v2094 = vpop.f32.mrb[0].mxu0
        %v2095 = vadd.f32 %v1597, %v2094
        %v2096 = vpop.f32.mrb[0].mxu0
        %v2097 = vadd.f32 %v1597, %v2096
        %2098 = vmatprep.mubr.bf16.mxu0 0
        %2099 = vmatmul.mubr.bf16.gmra.mrb[0].mxu0 %v1648
        %v2100 = vpop.f32.mrb[0].mxu0
        %v2101 = vadd.f32 %v1602, %v2100
        %v2102 = vpop.f32.mrb[0].mxu0
        %v2103 = vadd.f32 %v1602, %v2102
        %v2104 = vpop.f32.mrb[0].mxu0
        %v2105 = vadd.f32 %v1607, %v2104
        %v2106 = vpop.f32.mrb[0].mxu0
        %v2107 = vadd.f32 %v1607, %v2106
        %2108 = vdwg.mxu0
        %v2109 = vmax.f32 %v1692, 0.0
        %v2110 = vmax.f32 %v1694, 0.0
        %v2111 = vmax.f32 %v1805, 0.0
        %v2112 = vmax.f32 %v1807, 0.0
        %v2113 = vmax.f32 %v1918, 0.0
        %v2114 = vmax.f32 %v1920, 0.0
        %v2115 = vmax.f32 %v2031, 0.0
        %v2116 = vmax.f32 %v2033, 0.0
        %v2117 = vmax.f32 %v1696, 0.0
        %v2118 = vmax.f32 %v1698, 0.0
        %v2119 = vmax.f32 %v1809, 0.0
        %v2120 = vmax.f32 %v1811, 0.0
        %v2121 = vmax.f32 %v1922, 0.0
        %v2122 = vmax.f32 %v1924, 0.0
        %v2123 = vmax.f32 %v2035, 0.0
        %v2124 = vmax.f32 %v2037, 0.0
        %v2125 = vmax.f32 %v1702, 0.0
        %v2126 = vmax.f32 %v1704, 0.0
        %v2127 = vmax.f32 %v1815, 0.0
        %v2128 = vmax.f32 %v1817, 0.0
        %v2129 = vmax.f32 %v1928, 0.0
        %v2130 = vmax.f32 %v1930, 0.0
        %v2131 = vmax.f32 %v2041, 0.0
        %v2132 = vmax.f32 %v2043, 0.0
        %v2133 = vmax.f32 %v1706, 0.0
        %v2134 = vmax.f32 %v1708, 0.0
        %v2135 = vmax.f32 %v1819, 0.0
        %v2136 = vmax.f32 %v1821, 0.0
        %v2137 = vmax.f32 %v1932, 0.0
        %v2138 = vmax.f32 %v1934, 0.0
        %v2139 = vmax.f32 %v2045, 0.0
        %v2140 = vmax.f32 %v2047, 0.0
        %v2141 = vmax.f32 %v1712, 0.0
        %v2142 = vmax.f32 %v1714, 0.0
        %v2143 = vmax.f32 %v1825, 0.0
        %v2144 = vmax.f32 %v1827, 0.0
        %v2145 = vmax.f32 %v1938, 0.0
        %v2146 = vmax.f32 %v1940, 0.0
        %v2147 = vmax.f32 %v2051, 0.0
        %v2148 = vmax.f32 %v2053, 0.0
        %v2149 = vmax.f32 %v1716, 0.0
        %v2150 = vmax.f32 %v1718, 0.0
        %v2151 = vmax.f32 %v1829, 0.0
        %v2152 = vmax.f32 %v1831, 0.0
        %v2153 = vmax.f32 %v1942, 0.0
        %v2154 = vmax.f32 %v1944, 0.0
        %v2155 = vmax.f32 %v2055, 0.0
        %v2156 = vmax.f32 %v2057, 0.0
        %v2157 = vmax.f32 %v1722, 0.0
        %v2158 = vmax.f32 %v1724, 0.0
        %v2159 = vmax.f32 %v1835, 0.0
        %v2160 = vmax.f32 %v1837, 0.0
        %v2161 = vmax.f32 %v1948, 0.0
        %v2162 = vmax.f32 %v1950, 0.0
        %v2163 = vmax.f32 %v2061, 0.0
        %v2164 = vmax.f32 %v2063, 0.0
        %v2165 = vmax.f32 %v1726, 0.0
        %v2166 = vmax.f32 %v1728, 0.0
        %v2167 = vmax.f32 %v1839, 0.0
        %v2168 = vmax.f32 %v1841, 0.0
        %v2169 = vmax.f32 %v1952, 0.0
        %v2170 = vmax.f32 %v1954, 0.0
        %v2171 = vmax.f32 %v2065, 0.0
        %v2172 = vmax.f32 %v2067, 0.0
        %v2173 = vmax.f32 %v1732, 0.0
        %v2174 = vmax.f32 %v1734, 0.0
        %v2175 = vmax.f32 %v1845, 0.0
        %v2176 = vmax.f32 %v1847, 0.0
        %v2177 = vmax.f32 %v1958, 0.0
        %v2178 = vmax.f32 %v1960, 0.0
        %v2179 = vmax.f32 %v2071, 0.0
        %v2180 = vmax.f32 %v2073, 0.0
        %v2181 = vmax.f32 %v1736, 0.0
        %v2182 = vmax.f32 %v1738, 0.0
        %v2183 = vmax.f32 %v1849, 0.0
        %v2184 = vmax.f32 %v1851, 0.0
        %v2185 = vmax.f32 %v1962, 0.0
        %v2186 = vmax.f32 %v1964, 0.0
        %v2187 = vmax.f32 %v2075, 0.0
        %v2188 = vmax.f32 %v2077, 0.0
        %v2189 = vmax.f32 %v1742, 0.0
        %v2190 = vmax.f32 %v1744, 0.0
        %v2191 = vmax.f32 %v1855, 0.0
        %v2192 = vmax.f32 %v1857, 0.0
        %v2193 = vmax.f32 %v1968, 0.0
        %v2194 = vmax.f32 %v1970, 0.0
        %v2195 = vmax.f32 %v2081, 0.0
        %v2196 = vmax.f32 %v2083, 0.0
        %v2197 = vmax.f32 %v1746, 0.0
        %v2198 = vmax.f32 %v1748, 0.0
        %v2199 = vmax.f32 %v1859, 0.0
        %v2200 = vmax.f32 %v1861, 0.0
        %v2201 = vmax.f32 %v1972, 0.0
        %v2202 = vmax.f32 %v1974, 0.0
        %v2203 = vmax.f32 %v2085, 0.0
        %v2204 = vmax.f32 %v2087, 0.0
        %v2205 = vmax.f32 %v1752, 0.0
        %v2206 = vmax.f32 %v1754, 0.0
        %v2207 = vmax.f32 %v1865, 0.0
        %v2208 = vmax.f32 %v1867, 0.0
        %v2209 = vmax.f32 %v1978, 0.0
        %v2210 = vmax.f32 %v1980, 0.0
        %v2211 = vmax.f32 %v2091, 0.0
        %v2212 = vmax.f32 %v2093, 0.0
        %v2213 = vmax.f32 %v1756, 0.0
        %v2214 = vmax.f32 %v1758, 0.0
        %v2215 = vmax.f32 %v1869, 0.0
        %v2216 = vmax.f32 %v1871, 0.0
        %v2217 = vmax.f32 %v1982, 0.0
        %v2218 = vmax.f32 %v1984, 0.0
        %v2219 = vmax.f32 %v2095, 0.0
        %v2220 = vmax.f32 %v2097, 0.0
        %v2221 = vmax.f32 %v1762, 0.0
        %v2222 = vmax.f32 %v1764, 0.0
        %v2223 = vmax.f32 %v1875, 0.0
        %v2224 = vmax.f32 %v1877, 0.0
        %v2225 = vmax.f32 %v1988, 0.0
        %v2226 = vmax.f32 %v1990, 0.0
        %v2227 = vmax.f32 %v2101, 0.0
        %v2228 = vmax.f32 %v2103, 0.0
        %v2229 = vmax.f32 %v1766, 0.0
        %v2230 = vmax.f32 %v1768, 0.0
        %v2231 = vmax.f32 %v1879, 0.0
        %v2232 = vmax.f32 %v1881, 0.0
        %v2233 = vmax.f32 %v1992, 0.0
        %v2234 = vmax.f32 %v1994, 0.0
        %v2235 = vmax.f32 %v2105, 0.0
        %v2236 = vmax.f32 %v2107, 0.0
        %v2237 = vld [vmem:[%s5] sm:$0xf]
        %v2238 = vld [vmem:[%s5 + $0x4] sm:$0xf]
        %v2239 = vpack.c.bf16 %v2117, %v2109
        %v2240 = vpack.c.bf16 %v2118, %v2110
        %v2241 = vpack.c.bf16 %v2119, %v2111
        %v2242 = vpack.c.bf16 %v2120, %v2112
        %v2243 = vpack.c.bf16 %v2121, %v2113
        %v2244 = vpack.c.bf16 %v2122, %v2114
        %v2245 = vpack.c.bf16 %v2123, %v2115
        %v2246 = vpack.c.bf16 %v2124, %v2116
        %v2247 = vpack.c.bf16 %v2133, %v2125
        %v2248 = vpack.c.bf16 %v2134, %v2126
        %v2249 = vpack.c.bf16 %v2135, %v2127
        %v2250 = vpack.c.bf16 %v2136, %v2128
        %v2251 = vpack.c.bf16 %v2137, %v2129
        %v2252 = vpack.c.bf16 %v2138, %v2130
        %v2253 = vpack.c.bf16 %v2139, %v2131
        %v2254 = vpack.c.bf16 %v2140, %v2132
        %v2255 = vpack.c.bf16 %v2149, %v2141
        %v2256 = vpack.c.bf16 %v2150, %v2142
        %v2257 = vpack.c.bf16 %v2151, %v2143
        %v2258 = vpack.c.bf16 %v2152, %v2144
        %v2259 = vpack.c.bf16 %v2153, %v2145
        %v2260 = vpack.c.bf16 %v2154, %v2146
        %v2261 = vpack.c.bf16 %v2155, %v2147
        %v2262 = vpack.c.bf16 %v2156, %v2148
        %v2263 = vpack.c.bf16 %v2165, %v2157
        %v2264 = vpack.c.bf16 %v2166, %v2158
        %v2265 = vpack.c.bf16 %v2167, %v2159
        %v2266 = vpack.c.bf16 %v2168, %v2160
        %v2267 = vpack.c.bf16 %v2169, %v2161
        %v2268 = vpack.c.bf16 %v2170, %v2162
        %v2269 = vpack.c.bf16 %v2171, %v2163
        %v2270 = vpack.c.bf16 %v2172, %v2164
        %v2271 = vpack.c.bf16 %v2181, %v2173
        %v2272 = vpack.c.bf16 %v2182, %v2174
        %v2273 = vpack.c.bf16 %v2183, %v2175
        %v2274 = vpack.c.bf16 %v2184, %v2176
        %v2275 = vpack.c.bf16 %v2185, %v2177
        %v2276 = vpack.c.bf16 %v2186, %v2178
        %v2277 = vpack.c.bf16 %v2187, %v2179
        %v2278 = vpack.c.bf16 %v2188, %v2180
        %v2279 = vpack.c.bf16 %v2197, %v2189
        %v2280 = vpack.c.bf16 %v2198, %v2190
        %v2281 = vpack.c.bf16 %v2199, %v2191
        %v2282 = vpack.c.bf16 %v2200, %v2192
        %v2283 = vpack.c.bf16 %v2201, %v2193
        %v2284 = vpack.c.bf16 %v2202, %v2194
        %v2285 = vpack.c.bf16 %v2203, %v2195
        %v2286 = vpack.c.bf16 %v2204, %v2196
        %v2287 = vpack.c.bf16 %v2213, %v2205
        %v2288 = vpack.c.bf16 %v2214, %v2206
        %v2289 = vpack.c.bf16 %v2215, %v2207
        %v2290 = vpack.c.bf16 %v2216, %v2208
        %v2291 = vpack.c.bf16 %v2217, %v2209
        %v2292 = vpack.c.bf16 %v2218, %v2210
        %v2293 = vpack.c.bf16 %v2219, %v2211
        %v2294 = vpack.c.bf16 %v2220, %v2212
        %v2295 = vpack.c.bf16 %v2229, %v2221
        %v2296 = vpack.c.bf16 %v2230, %v2222
        %v2297 = vpack.c.bf16 %v2231, %v2223
        %v2298 = vpack.c.bf16 %v2232, %v2224
        %v2299 = vpack.c.bf16 %v2233, %v2225
        %v2300 = vpack.c.bf16 %v2234, %v2226
        %v2301 = vpack.c.bf16 %v2235, %v2227
        %v2302 = vpack.c.bf16 %v2236, %v2228
        %v2303 = vld [vmem:[%s6] sm:$0xff]
        %v2304 = vld [vmem:[%s6 + $0x8] sm:$0xff]
        %2306 = vset.pattern.permute.xlu0 0
        %2307 = vperm.xlu0 %2306, %v2303
        %v2308 = vpop.permute.xlu0 %2307
        %2311 = vset.pattern.permute.xlu0 0
        %2312 = vperm.xlu0 %2311, %v2304
        %v2313 = vpop.permute.xlu0 %2312
        %v2317 = vunpack.c.l.b16 %v2237
        %v2318 = vunpack.c.l.b16 %v2238
        %v2319 = vpack.c.b16 %v2318, %v2317
        %2321 = vmatprep.subr.bf16.mxu0 %v2240
        %2322 = vmatpush1.bf16.msra.mxu0 %v2239
        %2323 = vmatprep.subr.bf16.mxu0 %v2248
        %2324 = vmatpush1.bf16.msra.mxu0 %v2247
        %2325 = vmatprep.subr.bf16.mxu0 %v2256
        %2326 = vmatpush1.bf16.msra.mxu0 %v2255
        %2327 = vmatprep.subr.bf16.mxu0 %v2264
        %2328 = vmatpush1.bf16.msra.mxu0 %v2263
        %2329 = vmatprep.subr.bf16.mxu0 %v2272
        %2330 = vmatpush1.bf16.msra.mxu0 %v2271
        %2331 = vmatprep.subr.bf16.mxu0 %v2280
        %2332 = vmatpush1.bf16.msra.mxu0 %v2279
        %2333 = vmatprep.subr.bf16.mxu0 %v2288
        %2334 = vmatpush1.bf16.msra.mxu0 %v2287
        %2335 = vmatprep.subr.bf16.mxu0 %v2296
        %2336 = vmatpush1.bf16.msra.mxu0 %v2295
        %2337 = vmatprep.subr.bf16.mxu0 0
        %2338 = vmatpush1.bf16.msra.mxu0 0
        %2339 = vmatprep.subr.bf16.mxu0 0
        %2340 = vmatpush1.bf16.msra.mxu0 0
        %2341 = vmatprep.subr.bf16.mxu0 0
        %2342 = vmatpush1.bf16.msra.mxu0 0
        %2343 = vmatprep.subr.bf16.mxu0 0
        %2344 = vmatpush1.bf16.msra.mxu0 0
        %2345 = vmatprep.subr.bf16.mxu0 0
        %2346 = vmatpush1.bf16.msra.mxu0 0
        %2347 = vmatprep.subr.bf16.mxu0 0
        %2348 = vmatpush1.bf16.msra.mxu0 0
        %2349 = vmatprep.subr.bf16.mxu0 0
        %2350 = vmatpush1.bf16.msra.mxu0 0
        %2351 = vmatprep.subr.bf16.mxu0 0
        %2352 = vmatpush1.bf16.msra.mxu0 0
        %2353 = vmatprep.mubr.bf16.mxu0 0
        %2354 = vmatmul.mubr.bf16.gmra.mrb[0].mxu0 %v2319
        %v2355 = vpop.f32.mrb[0].mxu0
        %v2356 = vadd.f32 %v2308, %v2355
        %v2357 = vpop.f32.mrb[0].mxu0
        %v2358 = vadd.f32 %v2308, %v2357
        %v2359 = vpop.f32.mrb[0].mxu0
        %v2360 = vadd.f32 %v2313, %v2359
        %v2361 = vpop.f32.mrb[0].mxu0
        %v2362 = vadd.f32 %v2313, %v2361
        %2363 = vdwg.mxu0
        %2364 = vmatprep.subr.bf16.mxu0 %v2242
        %2365 = vmatpush1.bf16.msra.mxu0 %v2241
        %2366 = vmatprep.subr.bf16.mxu0 %v2250
        %2367 = vmatpush1.bf16.msra.mxu0 %v2249
        %2368 = vmatprep.subr.bf16.mxu0 %v2258
        %2369 = vmatpush1.bf16.msra.mxu0 %v2257
        %2370 = vmatprep.subr.bf16.mxu0 %v2266
        %2371 = vmatpush1.bf16.msra.mxu0 %v2265
        %2372 = vmatprep.subr.bf16.mxu0 %v2274
        %2373 = vmatpush1.bf16.msra.mxu0 %v2273
        %2374 = vmatprep.subr.bf16.mxu0 %v2282
        %2375 = vmatpush1.bf16.msra.mxu0 %v2281
        %2376 = vmatprep.subr.bf16.mxu0 %v2290
        %2377 = vmatpush1.bf16.msra.mxu0 %v2289
        %2378 = vmatprep.subr.bf16.mxu0 %v2298
        %2379 = vmatpush1.bf16.msra.mxu0 %v2297
        %2380 = vmatprep.subr.bf16.mxu0 0
        %2381 = vmatpush1.bf16.msra.mxu0 0
        %2382 = vmatprep.subr.bf16.mxu0 0
        %2383 = vmatpush1.bf16.msra.mxu0 0
        %2384 = vmatprep.subr.bf16.mxu0 0
        %2385 = vmatpush1.bf16.msra.mxu0 0
        %2386 = vmatprep.subr.bf16.mxu0 0
        %2387 = vmatpush1.bf16.msra.mxu0 0
        %2388 = vmatprep.subr.bf16.mxu0 0
        %2389 = vmatpush1.bf16.msra.mxu0 0
        %2390 = vmatprep.subr.bf16.mxu0 0
        %2391 = vmatpush1.bf16.msra.mxu0 0
        %2392 = vmatprep.subr.bf16.mxu0 0
        %2393 = vmatpush1.bf16.msra.mxu0 0
        %2394 = vmatprep.subr.bf16.mxu0 0
        %2395 = vmatpush1.bf16.msra.mxu0 0
        %2396 = vmatprep.mubr.bf16.mxu0 0
        %2397 = vmatmul.mubr.bf16.gmra.mrb[0].mxu0 %v2319
        %v2398 = vpop.f32.mrb[0].mxu0
        %v2399 = vadd.f32 %v2308, %v2398
        %v2400 = vpop.f32.mrb[0].mxu0
        %v2401 = vadd.f32 %v2308, %v2400
        %v2402 = vpop.f32.mrb[0].mxu0
        %v2403 = vadd.f32 %v2313, %v2402
        %v2404 = vpop.f32.mrb[0].mxu0
        %v2405 = vadd.f32 %v2313, %v2404
        %2406 = vdwg.mxu0
        %2407 = vmatprep.subr.bf16.mxu0 %v2244
        %2408 = vmatpush1.bf16.msra.mxu0 %v2243
        %2409 = vmatprep.subr.bf16.mxu0 %v2252
        %2410 = vmatpush1.bf16.msra.mxu0 %v2251
        %2411 = vmatprep.subr.bf16.mxu0 %v2260
        %2412 = vmatpush1.bf16.msra.mxu0 %v2259
        %2413 = vmatprep.subr.bf16.mxu0 %v2268
        %2414 = vmatpush1.bf16.msra.mxu0 %v2267
        %2415 = vmatprep.subr.bf16.mxu0 %v2276
        %2416 = vmatpush1.bf16.msra.mxu0 %v2275
        %2417 = vmatprep.subr.bf16.mxu0 %v2284
        %2418 = vmatpush1.bf16.msra.mxu0 %v2283
        %2419 = vmatprep.subr.bf16.mxu0 %v2292
        %2420 = vmatpush1.bf16.msra.mxu0 %v2291
        %2421 = vmatprep.subr.bf16.mxu0 %v2300
        %2422 = vmatpush1.bf16.msra.mxu0 %v2299
        %2423 = vmatprep.subr.bf16.mxu0 0
        %2424 = vmatpush1.bf16.msra.mxu0 0
        %2425 = vmatprep.subr.bf16.mxu0 0
        %2426 = vmatpush1.bf16.msra.mxu0 0
        %2427 = vmatprep.subr.bf16.mxu0 0
        %2428 = vmatpush1.bf16.msra.mxu0 0
        %2429 = vmatprep.subr.bf16.mxu0 0
        %2430 = vmatpush1.bf16.msra.mxu0 0
        %2431 = vmatprep.subr.bf16.mxu0 0
        %2432 = vmatpush1.bf16.msra.mxu0 0
        %2433 = vmatprep.subr.bf16.mxu0 0
        %2434 = vmatpush1.bf16.msra.mxu0 0
        %2435 = vmatprep.subr.bf16.mxu0 0
        %2436 = vmatpush1.bf16.msra.mxu0 0
        %2437 = vmatprep.subr.bf16.mxu0 0
        %2438 = vmatpush1.bf16.msra.mxu0 0
        %2439 = vmatprep.mubr.bf16.mxu0 0
        %2440 = vmatmul.mubr.bf16.gmra.mrb[0].mxu0 %v2319
        %v2441 = vpop.f32.mrb[0].mxu0
        %v2442 = vadd.f32 %v2308, %v2441
        %v2443 = vpop.f32.mrb[0].mxu0
        %v2444 = vadd.f32 %v2308, %v2443
        %v2445 = vpop.f32.mrb[0].mxu0
        %v2446 = vadd.f32 %v2313, %v2445
        %v2447 = vpop.f32.mrb[0].mxu0
        %v2448 = vadd.f32 %v2313, %v2447
        %2449 = vdwg.mxu0
        %2450 = vmatprep.subr.bf16.mxu0 %v2246
        %2451 = vmatpush1.bf16.msra.mxu0 %v2245
        %2452 = vmatprep.subr.bf16.mxu0 %v2254
        %2453 = vmatpush1.bf16.msra.mxu0 %v2253
        %2454 = vmatprep.subr.bf16.mxu0 %v2262
        %2455 = vmatpush1.bf16.msra.mxu0 %v2261
        %2456 = vmatprep.subr.bf16.mxu0 %v2270
        %2457 = vmatpush1.bf16.msra.mxu0 %v2269
        %2458 = vmatprep.subr.bf16.mxu0 %v2278
        %2459 = vmatpush1.bf16.msra.mxu0 %v2277
        %2460 = vmatprep.subr.bf16.mxu0 %v2286
        %2461 = vmatpush1.bf16.msra.mxu0 %v2285
        %2462 = vmatprep.subr.bf16.mxu0 %v2294
        %2463 = vmatpush1.bf16.msra.mxu0 %v2293
        %2464 = vmatprep.subr.bf16.mxu0 %v2302
        %2465 = vmatpush1.bf16.msra.mxu0 %v2301
        %2466 = vmatprep.subr.bf16.mxu0 0
        %2467 = vmatpush1.bf16.msra.mxu0 0
        %2468 = vmatprep.subr.bf16.mxu0 0
        %2469 = vmatpush1.bf16.msra.mxu0 0
        %2470 = vmatprep.subr.bf16.mxu0 0
        %2471 = vmatpush1.bf16.msra.mxu0 0
        %2472 = vmatprep.subr.bf16.mxu0 0
        %2473 = vmatpush1.bf16.msra.mxu0 0
        %2474 = vmatprep.subr.bf16.mxu0 0
        %2475 = vmatpush1.bf16.msra.mxu0 0
        %2476 = vmatprep.subr.bf16.mxu0 0
        %2477 = vmatpush1.bf16.msra.mxu0 0
        %2478 = vmatprep.subr.bf16.mxu0 0
        %2479 = vmatpush1.bf16.msra.mxu0 0
        %2480 = vmatprep.subr.bf16.mxu0 0
        %2481 = vmatpush1.bf16.msra.mxu0 0
        %2482 = vmatprep.mubr.bf16.mxu0 0
        %2483 = vmatmul.mubr.bf16.gmra.mrb[0].mxu0 %v2319
        %v2484 = vpop.f32.mrb[0].mxu0
        %v2485 = vadd.f32 %v2308, %v2484
        %v2486 = vpop.f32.mrb[0].mxu0
        %v2487 = vadd.f32 %v2308, %v2486
        %v2488 = vpop.f32.mrb[0].mxu0
        %v2489 = vadd.f32 %v2313, %v2488
        %v2490 = vpop.f32.mrb[0].mxu0
        %v2491 = vadd.f32 %v2313, %v2490
        %2492 = vdwg.mxu0
        %2493 = vst [vmem:[%s296] sm:$0xff] %v2356
        %2494 = vst [vmem:[%s296 + $0x8] sm:$0xff] %v2358
        %2495 = vst [vmem:[%s296 + $0x10] sm:$0xff] %v2399
        %2496 = vst [vmem:[%s296 + $0x18] sm:$0xff] %v2401
        %2497 = vst [vmem:[%s296 + $0x20] sm:$0xff] %v2442
        %2498 = vst [vmem:[%s296 + $0x28] sm:$0xff] %v2444
        %2499 = vst [vmem:[%s296 + $0x30] sm:$0xff] %v2485
        %2500 = vst [vmem:[%s296 + $0x38] sm:$0xff] %v2487
        %2501 = vst [vmem:[%s296 + $0x40] sm:$0xff] %v2360
        %2502 = vst [vmem:[%s296 + $0x48] sm:$0xff] %v2362
        %2503 = vst [vmem:[%s296 + $0x50] sm:$0xff] %v2403
        %2504 = vst [vmem:[%s296 + $0x58] sm:$0xff] %v2405
        %2505 = vst [vmem:[%s296 + $0x60] sm:$0xff] %v2446
        %2506 = vst [vmem:[%s296 + $0x68] sm:$0xff] %v2448
        %2507 = vst [vmem:[%s296 + $0x70] sm:$0xff] %v2489
        %2508 = vst [vmem:[%s296 + $0x78] sm:$0xff] %v2491
        %s2509 = sand.u32 %s197, 1
        %s2510 = scalar_lea.sflag [#allocation3], %s2509
        %s2511 = sand.u32 %s197, 1
        %s2512 = smul.addr %s2511, 128
        %s2513 = scalar_lea.vmem [#allocation2], %s2512
        // Predicated region
        $region49: #{tpu_custom_call.1} parent=47 // pred_check
          %p2514 = pneg %p207
        $region50: #{tpu_custom_call.1} parent=47 // pred_check_branch
          %2516 = sbr.rel (%p2514) target = $region52
        $region51: #{tpu_custom_call.1} parent=47 // pred_region
          %s2517 = smul.u32 8, %s26
          %s2519 = ssub.s32 2048, 2048
          %2520 = vsyncadd %s2510, %s2519
          %s2521 = smul.addr %s25, 16
          %s2522 = sadd.s32 %s2517, %s2521
          %s2523 = smul.addr %s2522, 128
          %s2524 = scalar_lea.hbm %s7, %s2523
          %s2525 = sshll.u32 %s2513, 4
          %s2526 = int_to_ptr.vmem [resolvable:$true] %s2525
          %2531 = dma.vmem_to_hbm [thread:$0]  %s2526, 2048, %s2524, %s2510, 1024, 1024, 64
        $region52: #{tpu_custom_call.1} parent=47 // pred_fallthru
          _
      $region48: #{tpu_custom_call.1} parent=5 // pred_fallthru
        _
      %p2532 = scmp.le.s32.totalorder 2, %s16
      // Predicated region
      $region53: #{tpu_custom_call.1} parent=5 // pred_check
        %p2533 = pneg %p2532
      $region54: #{tpu_custom_call.1} parent=5 // pred_check_branch
        %2535 = sbr.rel (%p2533) target = $region56
      $region55: #{tpu_custom_call.1} parent=5 // pred_region
        %s2536 = ssub.s32 %s16, 2
        // Predicated region
        $region57: #{tpu_custom_call.1} parent=55 // pred_check
          %p2537 = pneg %p213
        $region58: #{tpu_custom_call.1} parent=55 // pred_check_branch
          %2539 = sbr.rel (%p2537) target = $region60
        $region59: #{tpu_custom_call.1} parent=55 // pred_region
          %s2540 = sand.u32 %s198, 1
          %s2541 = scalar_lea.sflag [#allocation3], %s2540
          %s2542 = sand.u32 %s198, 1
          %s2543 = smul.addr %s2542, 128
          %s2544 = scalar_lea.vmem [#allocation2], %s2543
          %2545 = dma.done %s2541, 2048
        $region60: #{tpu_custom_call.1} parent=55 // pred_fallthru
          _
      $region56: #{tpu_custom_call.1} parent=5 // pred_fallthru
        _
    $region6: #{tpu_custom_call.1} parent=1 // loop_footer
      %s20 = sadd.s32 1, %s16
    $region7: #{tpu_custom_call.1} parent=1 // loop_footer_branch
      %15 = sbr.rel target = $region3
    $region8: #{tpu_custom_call.1} parent=1 // loop_exit
      _
    %2546 = vsyncpa [#allocation3], 1
    %s2547 = scalar_lea.sflag [#allocation3], 1
    %2548 = vsyncpa %s2547, 1

</llo_original>
